<compile_context>
chip_gen: v5e
topology: v5e:2x2
jax: 0.10.0
libtpu: 0.0.40
codegen_flags: <defaults>
</compile_context>

<pallas_src>
import numpy as np
import jax
import jax.numpy as jnp
from jax.experimental import pallas as pl
from jax.experimental.pallas import tpu as pltpu

# ------------------------- static configuration -------------------------
B = 2
SR = 16000
N_FFT = 64
HOP = 16
N_FREQ = N_FFT // 2 + 1            # 33
N_MELS = 24
DIM = 32                           # backbone hidden dim
INTER = 64                         # ConvNeXt intermediate dim
N_BLOCKS = 2
KSIZE = 7
HALF = KSIZE // 2
T_AUDIO = 256
PAD = N_FFT // 2                   # center padding = 32
N_FRAMES = 1 + (T_AUDIO + 2 * PAD - N_FFT) // HOP   # 17
T_PAD = (N_FRAMES - 1) * HOP + N_FFT                # 320
N_SHIFT = N_FFT // HOP                              # 4 (overlap factor)
ROWS = T_PAD // HOP                                 # 20
OUT_ROWS = T_AUDIO // HOP                           # 16
PAD_ROWS = 24                                       # N_FRAMES + 2*HALF = 23 -> round to 8
OLA_ROWS = 24                                       # ROWS = 20 -> round to 8

# ------------------------- packed slab row layout (offsets all multiples of 8) -------------------------
SLAB_COLS = 2 * N_FREQ                              # 66
OFF_WDFT = 0                                        # (64, 66) window-folded forward DFT
OFF_MELFB = OFF_WDFT + N_FFT                        # (33, 24) mel filterbank
OFF_ICWS = OFF_MELFB + 40                           # (66, 64) window-folded inverse DFT [re; im]
OFF_EMBW = OFF_ICWS + 72                            # 7 x (24, 32) embed-conv taps
OFF_DWW = OFF_EMBW + KSIZE * N_MELS                 # 2 x (8, 32)  depthwise taps (row per k)
OFF_P1W = OFF_DWW + N_BLOCKS * 8                    # 2 x (32, 64)
OFF_P2W = OFF_P1W + N_BLOCKS * DIM                  # 2 x (64, 32)
OFF_WOUTA = OFF_P2W + N_BLOCKS * INTER              # (32, 66) [w_mag | w_mag]
OFF_WOUTB = OFF_WOUTA + DIM                         # (32, 66) [w_ph  | w_ph ]
OFF_VEC = OFF_WOUTB + DIM                           # 19 bias/gain rows
OFF_ENV = OFF_VEC + 24                              # (16, 16) 1 / OLA window envelope
SLAB_ROWS = OFF_ENV + OUT_ROWS                      # 656

# vector row indices inside the OFF_VEC section
V_EMB_B, V_N0_G, V_N0_B, V_NF_G, V_NF_B, V_BOUT_A, V_BOUT_B = range(7)
# per-block base = 7 + 6*i, order: dw_b, ln_g, ln_b, p1_b, p2_b, ls_g

FRAME_IDX = (np.arange(N_FRAMES)[:, None] * HOP + np.arange(N_FFT)[None, :]).astype(np.int32)


# ------------------------- fused kernel -------------------------
def vocos_kernel(frames_ref, slab_ref, o_ref, pad_scr, ola_scr):
    f32 = jnp.float32

    def mat(off, rows, cols):
        return slab_ref[off:off + rows, 0:cols]

    def vrow(idx, cols):
        r = OFF_VEC + idx
        return slab_ref[r:r + 1, 0:cols]

    def layernorm(v, g, bb, eps=1e-6):
        mu = jnp.mean(v, axis=-1, keepdims=True)
        var = jnp.mean((v - mu) ** 2, axis=-1, keepdims=True)
        return (v - mu) * jax.lax.rsqrt(var + eps) * g + bb

    # ---------------- feature extractor: windowed DFT + |.| + mel + safe_log ----------------
    frames = frames_ref[0]                                            # (L, n_fft)
    spec = jnp.dot(frames, mat(OFF_WDFT, N_FFT, 2 * N_FREQ),
                   preferred_element_type=f32)                        # (L, 66) = [re | im]
    re = spec[:, :N_FREQ]
    im = spec[:, N_FREQ:]
    mag = jnp.sqrt(re * re + im * im)                                 # power = 1
    mel = jnp.dot(mag, mat(OFF_MELFB, N_FREQ, N_MELS),
                  preferred_element_type=f32)
    # TODO(synk): HTK triangular mel filterbank, no Slaney norm; match the checkpoint's
    # torchaudio MelSpectrogram settings if they differ.
    feats = jnp.log(jnp.maximum(mel, 1e-7))                           # safe_log, (L, n_mels)

    # ---------------- backbone: Conv1d embed + LN + ConvNeXt blocks + LN ----------------
    # zero-padded activations live in a VMEM scratch; the 7 shifted conv windows are plain
    # ref loads at sublane offsets (no value-relayout, no concats).
    pad_scr[...] = jnp.zeros_like(pad_scr)
    pad_scr[HALF:HALF + N_FRAMES, 0:N_MELS] = feats

    x = None
    for k in range(KSIZE):
        wk = mat(OFF_EMBW + k * N_MELS, N_MELS, DIM)                  # (24, 32)
        t = jnp.dot(pad_scr[k:k + N_FRAMES, 0:N_MELS], wk,
                    preferred_element_type=f32)
        x = t if x is None else x + t
    x = x + vrow(V_EMB_B, DIM)
    x = layernorm(x, vrow(V_N0_G, DIM), vrow(V_N0_B, DIM))

    for i in range(N_BLOCKS):
        vb = 7 + 6 * i
        res = x
        # depthwise conv1d (k=7, pad=3, groups=DIM) via padded scratch
        pad_scr[HALF:HALF + N_FRAMES, 0:DIM] = x
        y = None
        wrow = OFF_DWW + 8 * i
        for k in range(KSIZE):
            wk = slab_ref[wrow + k:wrow + k + 1, 0:DIM]               # (1, DIM)
            t = pad_scr[k:k + N_FRAMES, 0:DIM] * wk
            y = t if y is None else y + t
        y = y + vrow(vb + 0, DIM)
        y = layernorm(y, vrow(vb + 1, DIM), vrow(vb + 2, DIM))
        h = jnp.dot(y, mat(OFF_P1W + DIM * i, DIM, INTER),
                    preferred_element_type=f32) + vrow(vb + 3, INTER)
        # TODO(synk): torch nn.GELU() default is the exact erf form; tanh approx used here.
        h = jax.nn.gelu(h, approximate=True)
        h = jnp.dot(h, mat(OFF_P2W + INTER * i, INTER, DIM),
                    preferred_element_type=f32) + vrow(vb + 4, DIM)
        x = res + vrow(vb + 5, DIM) * h
    x = layernorm(x, vrow(V_NF_G, DIM), vrow(V_NF_B, DIM))

    # ---------------- ISTFT head ----------------
    # Column-duplicated head weights give [m | m] and [cos(ph) | sin(ph)] directly,
    # so there are no lane slices / lane concats before the inverse-DFT matmul.
    z_a = jnp.dot(x, mat(OFF_WOUTA, DIM, 2 * N_FREQ),
                  preferred_element_type=f32) + vrow(V_BOUT_A, 2 * N_FREQ)
    z_b = jnp.dot(x, mat(OFF_WOUTB, DIM, 2 * N_FREQ),
                  preferred_element_type=f32) + vrow(V_BOUT_B, 2 * N_FREQ)
    mm = jnp.minimum(jnp.exp(z_a), 1e2)                               # [m | m]  (exp then clip)
    cs = jnp.cos(z_b)                                                 # [cos ph | sin ph]
    ri = mm * cs                                                      # [m cos ph | m sin ph]
    fr = jnp.dot(ri, mat(OFF_ICWS, 2 * N_FREQ, N_FFT),
                 preferred_element_type=f32)                          # (L, n_fft), window folded in

    # overlap-add: 4 shifted read-modify-writes into a (rows-of-HOP) VMEM scratch
    ola_scr[...] = jnp.zeros_like(ola_scr)
    for j in range(N_SHIFT):
        ola_scr[j:j + N_FRAMES, :] = (ola_scr[j:j + N_FRAMES, :]
                                      + fr[:, j * HOP:(j + 1) * HOP])

    # multiply by precomputed 1/window-envelope and trim center padding (all in-kernel)
    start = PAD // HOP
    inv_env = slab_ref[OFF_ENV:OFF_ENV + OUT_ROWS, 0:HOP]
    o_ref[0] = ola_scr[start:start + OUT_ROWS, :] * inv_env


# ------------------------- host wrapper -------------------------
def vocos_forward(audio, slab):
    # reflect center-padding (torch stft center=True) + framing done host-side (tiny),
    # so the in-kernel STFT is one matmul against the window-folded DFT basis.
    padded = jnp.pad(audio, ((0, 0), (PAD, PAD)), mode="reflect")
    frames = jnp.take(padded, jnp.asarray(FRAME_IDX), axis=1)         # (B, L, n_fft)

    out = pl.pallas_call(
        vocos_kernel,
        out_shape=jax.ShapeDtypeStruct((B, OUT_ROWS, HOP), jnp.float32),
        grid=(B,),
        in_specs=[
            pl.BlockSpec((1, N_FRAMES, N_FFT), lambda b: (b, 0, 0)),
            pl.BlockSpec((SLAB_ROWS, SLAB_COLS), lambda b: (0, 0)),
        ],
        out_specs=pl.BlockSpec((1, OUT_ROWS, HOP), lambda b: (b, 0, 0)),
        scratch_shapes=[
            pltpu.VMEM((PAD_ROWS, DIM), jnp.float32),                 # padded conv activations
            pltpu.VMEM((OLA_ROWS, HOP), jnp.float32),                 # overlap-add accumulator
        ],
        compiler_params=pltpu.CompilerParams(dimension_semantics=("parallel",)),
    )(frames, slab)
    # (B, 16, 16) is contiguous row-major -> free reshape to (B, T_AUDIO)
    return out.reshape(B, T_AUDIO)


# ------------------------- constants & parameters -------------------------
def build_constants():
    n = np.arange(N_FFT)
    win = 0.5 * (1.0 - np.cos(2.0 * np.pi * n / N_FFT))               # periodic Hann
    k = np.arange(N_FREQ)
    ang_f = 2.0 * np.pi * np.outer(n, k) / N_FFT
    dft = np.concatenate([np.cos(ang_f), -np.sin(ang_f)], axis=1)     # (n_fft, 2*n_freq)
    wdft = win[:, None] * dft                                         # analysis window folded in

    ang_i = 2.0 * np.pi * np.outer(k, n) / N_FFT
    wgt = np.full((N_FREQ, 1), 2.0); wgt[0, 0] = 1.0; wgt[-1, 0] = 1.0
    icw = (wgt * np.cos(ang_i) / N_FFT) * win[None, :]                # windowed inverse bases
    isw = (-wgt * np.sin(ang_i) / N_FFT) * win[None, :]
    icws = np.concatenate([icw, isw], axis=0)                         # (2*n_freq, n_fft)

    # overlap-add window-squared envelope -> reciprocal (multiply in-kernel)
    env = np.zeros(T_PAD, np.float64)
    for l in range(N_FRAMES):
        env[l * HOP:l * HOP + N_FFT] += win ** 2
    env = np.maximum(env, 1e-8)
    inv_env = (1.0 / env)[PAD:PAD + T_AUDIO].reshape(OUT_ROWS, HOP)

    # triangular HTK mel filterbank
    f = np.linspace(0.0, SR / 2.0, N_FREQ)
    hz2mel = lambda h: 2595.0 * np.log10(1.0 + h / 700.0)
    mel2hz = lambda m: 700.0 * (10.0 ** (m / 2595.0) - 1.0)
    pts = mel2hz(np.linspace(hz2mel(0.0), hz2mel(SR / 2.0), N_MELS + 2))
    fb = np.zeros((N_FREQ, N_MELS), np.float64)
    for m in range(N_MELS):
        lo, ce, hi = pts[m], pts[m + 1], pts[m + 2]
        fb[:, m] = np.maximum(0.0, np.minimum((f - lo) / max(ce - lo, 1e-5),
                                              (hi - f) / max(hi - ce, 1e-5)))
    return {"wdft": wdft, "melfb": fb, "icws": icws, "inv_env": inv_env}


def build_params(key):
    ks = jax.random.split(key, 6)
    s = 0.05
    f32 = jnp.float32
    return {
        "emb_w": jax.random.normal(ks[0], (KSIZE, N_MELS, DIM), f32) * s,
        "emb_b": jnp.zeros((1, DIM), f32),
        "n0_g": jnp.ones((1, DIM), f32), "n0_b": jnp.zeros((1, DIM), f32),
        "dw_w": jax.random.normal(ks[1], (N_BLOCKS, KSIZE, DIM), f32) * s,
        "dw_b": jnp.zeros((N_BLOCKS, 1, DIM), f32),
        "ln_g": jnp.ones((N_BLOCKS, 1, DIM), f32),
        "ln_b": jnp.zeros((N_BLOCKS, 1, DIM), f32),
        "p1_w": jax.random.normal(ks[2], (N_BLOCKS, DIM, INTER), f32) * s,
        "p1_b": jnp.zeros((N_BLOCKS, 1, INTER), f32),
        "p2_w": jax.random.normal(ks[3], (N_BLOCKS, INTER, DIM), f32) * s,
        "p2_b": jnp.zeros((N_BLOCKS, 1, DIM), f32),
        "ls_g": jnp.full((N_BLOCKS, 1, DIM), 1e-2, f32),
        "nf_g": jnp.ones((1, DIM), f32), "nf_b": jnp.zeros((1, DIM), f32),
        "w_out": jax.random.normal(ks[4], (DIM, N_FFT + 2), f32) * s,
        "b_out": jnp.zeros((1, N_FFT + 2), f32),
    }


def pack_slab(params, consts):
    """Pack every weight/constant into one (SLAB_ROWS, 66) f32 slab -> one input DMA."""
    slab = np.zeros((SLAB_ROWS, SLAB_COLS), np.float32)

    def put(r0, a):
        a = np.asarray(a, np.float32)
        slab[r0:r0 + a.shape[0], :a.shape[1]] = a

    def putv(idx, v):
        v = np.asarray(v, np.float32).reshape(1, -1)
        slab[OFF_VEC + idx:OFF_VEC + idx + 1, :v.shape[1]] = v

    put(OFF_WDFT, consts["wdft"])
    put(OFF_MELFB, consts["melfb"])
    put(OFF_ICWS, consts["icws"])
    for k in range(KSIZE):
        put(OFF_EMBW + k * N_MELS, params["emb_w"][k])
    for i in range(N_BLOCKS):
        put(OFF_DWW + 8 * i, params["dw_w"][i])
        put(OFF_P1W + DIM * i, params["p1_w"][i])
        put(OFF_P2W + INTER * i, params["p2_w"][i])

    # head projection: duplicate the magnitude / phase column blocks so the kernel never
    # needs lane slices or a lane concat before the inverse DFT.
    w_out = np.asarray(params["w_out"], np.float32)
    b_out = np.asarray(params["b_out"], np.float32).reshape(-1)
    w_mag, w_ph = w_out[:, :N_FREQ], w_out[:, N_FREQ:]
    b_mag, b_ph = b_out[:N_FREQ], b_out[N_FREQ:]
    put(OFF_WOUTA, np.concatenate([w_mag, w_mag], axis=1))
    put(OFF_WOUTB, np.concatenate([w_ph, w_ph], axis=1))

    putv(V_EMB_B, params["emb_b"]); putv(V_N0_G, params["n0_g"]); putv(V_N0_B, params["n0_b"])
    putv(V_NF_G, params["nf_g"]); putv(V_NF_B, params["nf_b"])
    putv(V_BOUT_A, np.concatenate([b_mag, b_mag]))
    putv(V_BOUT_B, np.concatenate([b_ph, b_ph - np.pi / 2.0]))   # cos(ph - pi/2) = sin(ph)
    for i in range(N_BLOCKS):
        vb = 7 + 6 * i
        putv(vb + 0, params["dw_b"][i]); putv(vb + 1, params["ln_g"][i])
        putv(vb + 2, params["ln_b"][i]); putv(vb + 3, params["p1_b"][i])
        putv(vb + 4, params["p2_b"][i]); putv(vb + 5, params["ls_g"][i])

    put(OFF_ENV, consts["inv_env"])
    return jnp.asarray(slab)


if __name__ == "__main__":
    key = jax.random.PRNGKey(0)
    k_param, k_audio = jax.random.split(key)
    consts = build_constants()
    params = build_params(k_param)
    slab = pack_slab(params, consts)
    audio_in = jax.random.normal(k_audio, (B, T_AUDIO), jnp.float32)

    fwd = jax.jit(vocos_forward)
    audio_out = jax.block_until_ready(fwd(audio_in, slab))

    assert audio_out.shape == (B, T_AUDIO), audio_out.shape
    assert bool(jnp.all(jnp.isfinite(audio_out)))
    print("KERNEL_OK")
</pallas_src>

<mosaic_0001>
module attributes {stable_mosaic.version = 11 : i64} {
  func.func @vocos_kernel(%arg0: i32, %arg1: memref<1x17x64xf32, #tpu.memory_space<vmem>>, %arg2: memref<656x66xf32, #tpu.memory_space<vmem>>, %arg3: memref<1x16x16xf32, #tpu.memory_space<vmem>>, %arg4: memref<24x32xf32, #tpu.memory_space<vmem>>, %arg5: memref<24x16xf32, #tpu.memory_space<vmem>>) attributes {dimension_semantics = [#tpu.dimension_semantics<parallel>], iteration_bounds = array<i64: 2>, scalar_prefetch = 0 : i64, scratch_operands = 2 : i64, tpu.core_type = #tpu.core_type<tc>, window_params = [{transform_indices = @transform_0, window_bounds = array<i64: 1, 17, 64>}, {pipeline_mode = #tpu.pipeline_mode<synchronous>, transform_indices = @transform_1, window_bounds = array<i64: 656, 66>}, {transform_indices = @transform_2, window_bounds = array<i64: 1, 16, 16>}]} {
    %c0 = arith.constant 0 : index
    %c0_0 = arith.constant 0 : index
    %c0_1 = arith.constant 0 : index
    %0 = vector.load %arg1[%c0, %c0_0, %c0_1] : memref<1x17x64xf32, #tpu.memory_space<vmem>>, vector<1x17x64xf32>
    %1 = vector.shape_cast %0 : vector<1x17x64xf32> to vector<17x64xf32>
    %c0_2 = arith.constant 0 : index
    %c0_3 = arith.constant 0 : index
    %2 = vector.load %arg2[%c0_2, %c0_3] : memref<656x66xf32, #tpu.memory_space<vmem>>, vector<64x66xf32>
    %cst = arith.constant dense<0.000000e+00> : vector<17x66xf32>
    %3 = tpu.matmul %1, %2, %cst {dimension_numbers = #tpu.dot_dimension_numbers<[1], [0], [0], [1], [0, 0, 1, 1], [], []>} : vector<17x64xf32>, vector<64x66xf32>, vector<17x66xf32> -> vector<17x66xf32>
    %4 = vector.extract_strided_slice %3 {offsets = [0, 0], sizes = [17, 33], strides = [1, 1]} : vector<17x66xf32> to vector<17x33xf32>
    %5 = vector.extract_strided_slice %3 {offsets = [0, 33], sizes = [17, 33], strides = [1, 1]} : vector<17x66xf32> to vector<17x33xf32>
    %6 = arith.mulf %4, %4 : vector<17x33xf32>
    %7 = arith.mulf %5, %5 : vector<17x33xf32>
    %8 = arith.addf %6, %7 : vector<17x33xf32>
    %9 = math.sqrt %8 : vector<17x33xf32>
    %c64 = arith.constant 64 : index
    %c0_4 = arith.constant 0 : index
    %10 = vector.load %arg2[%c64, %c0_4] : memref<656x66xf32, #tpu.memory_space<vmem>>, vector<33x24xf32>
    %cst_5 = arith.constant dense<0.000000e+00> : vector<17x24xf32>
    %11 = tpu.matmul %9, %10, %cst_5 {dimension_numbers = #tpu.dot_dimension_numbers<[1], [0], [0], [1], [0, 0, 1, 1], [], []>} : vector<17x33xf32>, vector<33x24xf32>, vector<17x24xf32> -> vector<17x24xf32>
    %cst_6 = arith.constant 1.000000e-07 : f32
    %12 = vector.broadcast %cst_6 : f32 to vector<17x24xf32>
    %13 = arith.maximumf %11, %12 : vector<17x24xf32>
    %14 = math.log %13 : vector<17x24xf32>
    %cst_7 = arith.constant 0.000000e+00 : f32
    %15 = vector.broadcast %cst_7 : f32 to vector<24x32xf32>
    %c0_8 = arith.constant 0 : index
    %c0_9 = arith.constant 0 : index
    %16 = vector.load %arg4[%c0_8, %c0_9] : memref<24x32xf32, #tpu.memory_space<vmem>>, vector<24x32xf32>
    tpu.vector_store %arg4[%c0_8, %c0_9], %15 {strides = array<i32>} : memref<24x32xf32, #tpu.memory_space<vmem>>, vector<24x32xf32>,
    %c3 = arith.constant 3 : index
    %c0_10 = arith.constant 0 : index
    %17 = vector.load %arg4[%c3, %c0_10] : memref<24x32xf32, #tpu.memory_space<vmem>>, vector<17x24xf32>
    tpu.vector_store %arg4[%c3, %c0_10], %14 {strides = array<i32>} : memref<24x32xf32, #tpu.memory_space<vmem>>, vector<17x24xf32>,
    %c176 = arith.constant 176 : index
    %c0_11 = arith.constant 0 : index
    %18 = vector.load %arg2[%c176, %c0_11] : memref<656x66xf32, #tpu.memory_space<vmem>>, vector<24x32xf32>
    %c0_12 = arith.constant 0 : index
    %c0_13 = arith.constant 0 : index
    %19 = vector.load %arg4[%c0_12, %c0_13] : memref<24x32xf32, #tpu.memory_space<vmem>>, vector<17x24xf32>
    %cst_14 = arith.constant dense<0.000000e+00> : vector<17x32xf32>
    %20 = tpu.matmul %19, %18, %cst_14 {dimension_numbers = #tpu.dot_dimension_numbers<[1], [0], [0], [1], [0, 0, 1, 1], [], []>} : vector<17x24xf32>, vector<24x32xf32>, vector<17x32xf32> -> vector<17x32xf32>
    %c200 = arith.constant 200 : index
    %c0_15 = arith.constant 0 : index
    %21 = vector.load %arg2[%c200, %c0_15] : memref<656x66xf32, #tpu.memory_space<vmem>>, vector<24x32xf32>
    %c1 = arith.constant 1 : index
    %c0_16 = arith.constant 0 : index
    %22 = vector.load %arg4[%c1, %c0_16] : memref<24x32xf32, #tpu.memory_space<vmem>>, vector<17x24xf32>
    %cst_17 = arith.constant dense<0.000000e+00> : vector<17x32xf32>
    %23 = tpu.matmul %22, %21, %cst_17 {dimension_numbers = #tpu.dot_dimension_numbers<[1], [0], [0], [1], [0, 0, 1, 1], [], []>} : vector<17x24xf32>, vector<24x32xf32>, vector<17x32xf32> -> vector<17x32xf32>
    %24 = arith.addf %20, %23 : vector<17x32xf32>
    %c224 = arith.constant 224 : index
    %c0_18 = arith.constant 0 : index
    %25 = vector.load %arg2[%c224, %c0_18] : memref<656x66xf32, #tpu.memory_space<vmem>>, vector<24x32xf32>
    %c2 = arith.constant 2 : index
    %c0_19 = arith.constant 0 : index
    %26 = vector.load %arg4[%c2, %c0_19] : memref<24x32xf32, #tpu.memory_space<vmem>>, vector<17x24xf32>
    %cst_20 = arith.constant dense<0.000000e+00> : vector<17x32xf32>
    %27 = tpu.matmul %26, %25, %cst_20 {dimension_numbers = #tpu.dot_dimension_numbers<[1], [0], [0], [1], [0, 0, 1, 1], [], []>} : vector<17x24xf32>, vector<24x32xf32>, vector<17x32xf32> -> vector<17x32xf32>
    %28 = arith.addf %24, %27 : vector<17x32xf32>
    %c248 = arith.constant 248 : index
    %c0_21 = arith.constant 0 : index
    %29 = vector.load %arg2[%c248, %c0_21] : memref<656x66xf32, #tpu.memory_space<vmem>>, vector<24x32xf32>
    %c3_22 = arith.constant 3 : index
    %c0_23 = arith.constant 0 : index
    %30 = vector.load %arg4[%c3_22, %c0_23] : memref<24x32xf32, #tpu.memory_space<vmem>>, vector<17x24xf32>
    %cst_24 = arith.constant dense<0.000000e+00> : vector<17x32xf32>
    %31 = tpu.matmul %30, %29, %cst_24 {dimension_numbers = #tpu.dot_dimension_numbers<[1], [0], [0], [1], [0, 0, 1, 1], [], []>} : vector<17x24xf32>, vector<24x32xf32>, vector<17x32xf32> -> vector<17x32xf32>
    %32 = arith.addf %28, %31 : vector<17x32xf32>
    %c272 = arith.constant 272 : index
    %c0_25 = arith.constant 0 : index
    %33 = vector.load %arg2[%c272, %c0_25] : memref<656x66xf32, #tpu.memory_space<vmem>>, vector<24x32xf32>
    %c4 = arith.constant 4 : index
    %c0_26 = arith.constant 0 : index
    %34 = vector.load %arg4[%c4, %c0_26] : memref<24x32xf32, #tpu.memory_space<vmem>>, vector<17x24xf32>
    %cst_27 = arith.constant dense<0.000000e+00> : vector<17x32xf32>
    %35 = tpu.matmul %34, %33, %cst_27 {dimension_numbers = #tpu.dot_dimension_numbers<[1], [0], [0], [1], [0, 0, 1, 1], [], []>} : vector<17x24xf32>, vector<24x32xf32>, vector<17x32xf32> -> vector<17x32xf32>
    %36 = arith.addf %32, %35 : vector<17x32xf32>
    %c296 = arith.constant 296 : index
    %c0_28 = arith.constant 0 : index
    %37 = vector.load %arg2[%c296, %c0_28] : memref<656x66xf32, #tpu.memory_space<vmem>>, vector<24x32xf32>
    %c5 = arith.constant 5 : index
    %c0_29 = arith.constant 0 : index
    %38 = vector.load %arg4[%c5, %c0_29] : memref<24x32xf32, #tpu.memory_space<vmem>>, vector<17x24xf32>
    %cst_30 = arith.constant dense<0.000000e+00> : vector<17x32xf32>
    %39 = tpu.matmul %38, %37, %cst_30 {dimension_numbers = #tpu.dot_dimension_numbers<[1], [0], [0], [1], [0, 0, 1, 1], [], []>} : vector<17x24xf32>, vector<24x32xf32>, vector<17x32xf32> -> vector<17x32xf32>
    %40 = arith.addf %36, %39 : vector<17x32xf32>
    %c320 = arith.constant 320 : index
    %c0_31 = arith.constant 0 : index
    %41 = vector.load %arg2[%c320, %c0_31] : memref<656x66xf32, #tpu.memory_space<vmem>>, vector<24x32xf32>
    %c6 = arith.constant 6 : index
    %c0_32 = arith.constant 0 : index
    %42 = vector.load %arg4[%c6, %c0_32] : memref<24x32xf32, #tpu.memory_space<vmem>>, vector<17x24xf32>
    %cst_33 = arith.constant dense<0.000000e+00> : vector<17x32xf32>
    %43 = tpu.matmul %42, %41, %cst_33 {dimension_numbers = #tpu.dot_dimension_numbers<[1], [0], [0], [1], [0, 0, 1, 1], [], []>} : vector<17x24xf32>, vector<24x32xf32>, vector<17x32xf32> -> vector<17x32xf32>
    %44 = arith.addf %40, %43 : vector<17x32xf32>
    %c616 = arith.constant 616 : index
    %c0_34 = arith.constant 0 : index
    %45 = vector.load %arg2[%c616, %c0_34] : memref<656x66xf32, #tpu.memory_space<vmem>>, vector<1x32xf32>
    %46 = vector.broadcast %45 : vector<1x32xf32> to vector<17x32xf32>
    %47 = arith.addf %44, %46 : vector<17x32xf32>
    %c617 = arith.constant 617 : index
    %c0_35 = arith.constant 0 : index
    %48 = vector.load %arg2[%c617, %c0_35] : memref<656x66xf32, #tpu.memory_space<vmem>>, vector<1x32xf32>
    %c618 = arith.constant 618 : index
    %c0_36 = arith.constant 0 : index
    %49 = vector.load %arg2[%c618, %c0_36] : memref<656x66xf32, #tpu.memory_space<vmem>>, vector<1x32xf32>
    %cst_37 = arith.constant dense<0.000000e+00> : vector<17xf32>
    %50 = vector.multi_reduction <add>, %47, %cst_37 [1] : vector<17x32xf32> to vector<17xf32>
    %51 = vector.shape_cast %50 : vector<17xf32> to vector<17x1xf32>
    %cst_38 = arith.constant 3.200000e+01 : f32
    %52 = vector.broadcast %cst_38 : f32 to vector<17x1xf32>
    %53 = arith.divf %51, %52 : vector<17x1xf32>
    %54 = vector.broadcast %53 : vector<17x1xf32> to vector<17x32xf32>
    %55 = arith.subf %47, %54 : vector<17x32xf32>
    %56 = arith.mulf %55, %55 : vector<17x32xf32>
    %cst_39 = arith.constant dense<0.000000e+00> : vector<17xf32>
    %57 = vector.multi_reduction <add>, %56, %cst_39 [1] : vector<17x32xf32> to vector<17xf32>
    %58 = vector.shape_cast %57 : vector<17xf32> to vector<17x1xf32>
    %cst_40 = arith.constant 3.200000e+01 : f32
    %59 = vector.broadcast %cst_40 : f32 to vector<17x1xf32>
    %60 = arith.divf %58, %59 : vector<17x1xf32>
    %61 = vector.broadcast %53 : vector<17x1xf32> to vector<17x32xf32>
    %62 = arith.subf %47, %61 : vector<17x32xf32>
    %cst_41 = arith.constant 9.99999997E-7 : f32
    %63 = vector.broadcast %cst_41 : f32 to vector<17x1xf32>
    %64 = arith.addf %60, %63 : vector<17x1xf32>
    %65 = math.rsqrt %64 : vector<17x1xf32>
    %66 = vector.broadcast %65 : vector<17x1xf32> to vector<17x32xf32>
    %67 = arith.mulf %62, %66 : vector<17x32xf32>
    %68 = vector.broadcast %48 : vector<1x32xf32> to vector<17x32xf32>
    %69 = arith.mulf %67, %68 : vector<17x32xf32>
    %70 = vector.broadcast %49 : vector<1x32xf32> to vector<17x32xf32>
    %71 = arith.addf %69, %70 : vector<17x32xf32>
    %c3_42 = arith.constant 3 : index
    %c0_43 = arith.constant 0 : index
    %72 = vector.load %arg4[%c3_42, %c0_43] : memref<24x32xf32, #tpu.memory_space<vmem>>, vector<17x32xf32>
    tpu.vector_store %arg4[%c3_42, %c0_43], %71 {strides = array<i32>} : memref<24x32xf32, #tpu.memory_space<vmem>>, vector<17x32xf32>,
    %c344 = arith.constant 344 : index
    %c0_44 = arith.constant 0 : index
    %73 = vector.load %arg2[%c344, %c0_44] : memref<656x66xf32, #tpu.memory_space<vmem>>, vector<1x32xf32>
    %c0_45 = arith.constant 0 : index
    %c0_46 = arith.constant 0 : index
    %74 = vector.load %arg4[%c0_45, %c0_46] : memref<24x32xf32, #tpu.memory_space<vmem>>, vector<17x32xf32>
    %75 = vector.broadcast %73 : vector<1x32xf32> to vector<17x32xf32>
    %76 = arith.mulf %74, %75 : vector<17x32xf32>
    %c345 = arith.constant 345 : index
    %c0_47 = arith.constant 0 : index
    %77 = vector.load %arg2[%c345, %c0_47] : memref<656x66xf32, #tpu.memory_space<vmem>>, vector<1x32xf32>
    %c1_48 = arith.constant 1 : index
    %c0_49 = arith.constant 0 : index
    %78 = vector.load %arg4[%c1_48, %c0_49] : memref<24x32xf32, #tpu.memory_space<vmem>>, vector<17x32xf32>
    %79 = vector.broadcast %77 : vector<1x32xf32> to vector<17x32xf32>
    %80 = arith.mulf %78, %79 : vector<17x32xf32>
    %81 = arith.addf %76, %80 : vector<17x32xf32>
    %c346 = arith.constant 346 : index
    %c0_50 = arith.constant 0 : index
    %82 = vector.load %arg2[%c346, %c0_50] : memref<656x66xf32, #tpu.memory_space<vmem>>, vector<1x32xf32>
    %c2_51 = arith.constant 2 : index
    %c0_52 = arith.constant 0 : index
    %83 = vector.load %arg4[%c2_51, %c0_52] : memref<24x32xf32, #tpu.memory_space<vmem>>, vector<17x32xf32>
    %84 = vector.broadcast %82 : vector<1x32xf32> to vector<17x32xf32>
    %85 = arith.mulf %83, %84 : vector<17x32xf32>
    %86 = arith.addf %81, %85 : vector<17x32xf32>
    %c347 = arith.constant 347 : index
    %c0_53 = arith.constant 0 : index
    %87 = vector.load %arg2[%c347, %c0_53] : memref<656x66xf32, #tpu.memory_space<vmem>>, vector<1x32xf32>
    %c3_54 = arith.constant 3 : index
    %c0_55 = arith.constant 0 : index
    %88 = vector.load %arg4[%c3_54, %c0_55] : memref<24x32xf32, #tpu.memory_space<vmem>>, vector<17x32xf32>
    %89 = vector.broadcast %87 : vector<1x32xf32> to vector<17x32xf32>
    %90 = arith.mulf %88, %89 : vector<17x32xf32>
    %91 = arith.addf %86, %90 : vector<17x32xf32>
    %c348 = arith.constant 348 : index
    %c0_56 = arith.constant 0 : index
    %92 = vector.load %arg2[%c348, %c0_56] : memref<656x66xf32, #tpu.memory_space<vmem>>, vector<1x32xf32>
    %c4_57 = arith.constant 4 : index
    %c0_58 = arith.constant 0 : index
    %93 = vector.load %arg4[%c4_57, %c0_58] : memref<24x32xf32, #tpu.memory_space<vmem>>, vector<17x32xf32>
    %94 = vector.broadcast %92 : vector<1x32xf32> to vector<17x32xf32>
    %95 = arith.mulf %93, %94 : vector<17x32xf32>
    %96 = arith.addf %91, %95 : vector<17x32xf32>
    %c349 = arith.constant 349 : index
    %c0_59 = arith.constant 0 : index
    %97 = vector.load %arg2[%c349, %c0_59] : memref<656x66xf32, #tpu.memory_space<vmem>>, vector<1x32xf32>
    %c5_60 = arith.constant 5 : index
    %c0_61 = arith.constant 0 : index
    %98 = vector.load %arg4[%c5_60, %c0_61] : memref<24x32xf32, #tpu.memory_space<vmem>>, vector<17x32xf32>
    %99 = vector.broadcast %97 : vector<1x32xf32> to vector<17x32xf32>
    %100 = arith.mulf %98, %99 : vector<17x32xf32>
    %101 = arith.addf %96, %100 : vector<17x32xf32>
    %c350 = arith.constant 350 : index
    %c0_62 = arith.constant 0 : index
    %102 = vector.load %arg2[%c350, %c0_62] : memref<656x66xf32, #tpu.memory_space<vmem>>, vector<1x32xf32>
    %c6_63 = arith.constant 6 : index
    %c0_64 = arith.constant 0 : index
    %103 = vector.load %arg4[%c6_63, %c0_64] : memref<24x32xf32, #tpu.memory_space<vmem>>, vector<17x32xf32>
    %104 = vector.broadcast %102 : vector<1x32xf32> to vector<17x32xf32>
    %105 = arith.mulf %103, %104 : vector<17x32xf32>
    %106 = arith.addf %101, %105 : vector<17x32xf32>
    %c623 = arith.constant 623 : index
    %c0_65 = arith.constant 0 : index
    %107 = vector.load %arg2[%c623, %c0_65] : memref<656x66xf32, #tpu.memory_space<vmem>>, vector<1x32xf32>
    %108 = vector.broadcast %107 : vector<1x32xf32> to vector<17x32xf32>
    %109 = arith.addf %106, %108 : vector<17x32xf32>
    %c624 = arith.constant 624 : index
    %c0_66 = arith.constant 0 : index
    %110 = vector.load %arg2[%c624, %c0_66] : memref<656x66xf32, #tpu.memory_space<vmem>>, vector<1x32xf32>
    %c625 = arith.constant 625 : index
    %c0_67 = arith.constant 0 : index
    %111 = vector.load %arg2[%c625, %c0_67] : memref<656x66xf32, #tpu.memory_space<vmem>>, vector<1x32xf32>
    %cst_68 = arith.constant dense<0.000000e+00> : vector<17xf32>
    %112 = vector.multi_reduction <add>, %109, %cst_68 [1] : vector<17x32xf32> to vector<17xf32>
    %113 = vector.shape_cast %112 : vector<17xf32> to vector<17x1xf32>
    %cst_69 = arith.constant 3.200000e+01 : f32
    %114 = vector.broadcast %cst_69 : f32 to vector<17x1xf32>
    %115 = arith.divf %113, %114 : vector<17x1xf32>
    %116 = vector.broadcast %115 : vector<17x1xf32> to vector<17x32xf32>
    %117 = arith.subf %109, %116 : vector<17x32xf32>
    %118 = arith.mulf %117, %117 : vector<17x32xf32>
    %cst_70 = arith.constant dense<0.000000e+00> : vector<17xf32>
    %119 = vector.multi_reduction <add>, %118, %cst_70 [1] : vector<17x32xf32> to vector<17xf32>
    %120 = vector.shape_cast %119 : vector<17xf32> to vector<17x1xf32>
    %cst_71 = arith.constant 3.200000e+01 : f32
    %121 = vector.broadcast %cst_71 : f32 to vector<17x1xf32>
    %122 = arith.divf %120, %121 : vector<17x1xf32>
    %123 = vector.broadcast %115 : vector<17x1xf32> to vector<17x32xf32>
    %124 = arith.subf %109, %123 : vector<17x32xf32>
    %cst_72 = arith.constant 9.99999997E-7 : f32
    %125 = vector.broadcast %cst_72 : f32 to vector<17x1xf32>
    %126 = arith.addf %122, %125 : vector<17x1xf32>
    %127 = math.rsqrt %126 : vector<17x1xf32>
    %128 = vector.broadcast %127 : vector<17x1xf32> to vector<17x32xf32>
    %129 = arith.mulf %124, %128 : vector<17x32xf32>
    %130 = vector.broadcast %110 : vector<1x32xf32> to vector<17x32xf32>
    %131 = arith.mulf %129, %130 : vector<17x32xf32>
    %132 = vector.broadcast %111 : vector<1x32xf32> to vector<17x32xf32>
    %133 = arith.addf %131, %132 : vector<17x32xf32>
    %c360 = arith.constant 360 : index
    %c0_73 = arith.constant 0 : index
    %134 = vector.load %arg2[%c360, %c0_73] : memref<656x66xf32, #tpu.memory_space<vmem>>, vector<32x64xf32>
    %cst_74 = arith.constant dense<0.000000e+00> : vector<17x64xf32>
    %135 = tpu.matmul %133, %134, %cst_74 {dimension_numbers = #tpu.dot_dimension_numbers<[1], [0], [0], [1], [0, 0, 1, 1], [], []>} : vector<17x32xf32>, vector<32x64xf32>, vector<17x64xf32> -> vector<17x64xf32>
    %c626 = arith.constant 626 : index
    %c0_75 = arith.constant 0 : index
    %136 = vector.load %arg2[%c626, %c0_75] : memref<656x66xf32, #tpu.memory_space<vmem>>, vector<1x64xf32>
    %137 = vector.broadcast %136 : vector<1x64xf32> to vector<17x64xf32>
    %138 = arith.addf %135, %137 : vector<17x64xf32>
    %139 = arith.mulf %138, %138 : vector<17x64xf32>
    %140 = arith.mulf %138, %139 : vector<17x64xf32>
    %cst_76 = arith.constant 4.471500e-02 : f32
    %141 = vector.broadcast %cst_76 : f32 to vector<17x64xf32>
    %142 = arith.mulf %141, %140 : vector<17x64xf32>
    %143 = arith.addf %138, %142 : vector<17x64xf32>
    %cst_77 = arith.constant 0.797884583 : f32
    %144 = vector.broadcast %cst_77 : f32 to vector<17x64xf32>
    %145 = arith.mulf %144, %143 : vector<17x64xf32>
    %146 = math.tanh %145 : vector<17x64xf32>
    %cst_78 = arith.constant 1.000000e+00 : f32
    %147 = vector.broadcast %cst_78 : f32 to vector<17x64xf32>
    %148 = arith.addf %147, %146 : vector<17x64xf32>
    %cst_79 = arith.constant 5.000000e-01 : f32
    %149 = vector.broadcast %cst_79 : f32 to vector<17x64xf32>
    %150 = arith.mulf %149, %148 : vector<17x64xf32>
    %151 = arith.mulf %138, %150 : vector<17x64xf32>
    %c424 = arith.constant 424 : index
    %c0_80 = arith.constant 0 : index
    %152 = vector.load %arg2[%c424, %c0_80] : memref<656x66xf32, #tpu.memory_space<vmem>>, vector<64x32xf32>
    %cst_81 = arith.constant dense<0.000000e+00> : vector<17x32xf32>
    %153 = tpu.matmul %151, %152, %cst_81 {dimension_numbers = #tpu.dot_dimension_numbers<[1], [0], [0], [1], [0, 0, 1, 1], [], []>} : vector<17x64xf32>, vector<64x32xf32>, vector<17x32xf32> -> vector<17x32xf32>
    %c627 = arith.constant 627 : index
    %c0_82 = arith.constant 0 : index
    %154 = vector.load %arg2[%c627, %c0_82] : memref<656x66xf32, #tpu.memory_space<vmem>>, vector<1x32xf32>
    %155 = vector.broadcast %154 : vector<1x32xf32> to vector<17x32xf32>
    %156 = arith.addf %153, %155 : vector<17x32xf32>
    %c628 = arith.constant 628 : index
    %c0_83 = arith.constant 0 : index
    %157 = vector.load %arg2[%c628, %c0_83] : memref<656x66xf32, #tpu.memory_space<vmem>>, vector<1x32xf32>
    %158 = vector.broadcast %157 : vector<1x32xf32> to vector<17x32xf32>
    %159 = arith.mulf %158, %156 : vector<17x32xf32>
    %160 = arith.addf %71, %159 : vector<17x32xf32>
    %c3_84 = arith.constant 3 : index
    %c0_85 = arith.constant 0 : index
    %161 = vector.load %arg4[%c3_84, %c0_85] : memref<24x32xf32, #tpu.memory_space<vmem>>, vector<17x32xf32>
    tpu.vector_store %arg4[%c3_84, %c0_85], %160 {strides = array<i32>} : memref<24x32xf32, #tpu.memory_space<vmem>>, vector<17x32xf32>,
    %c352 = arith.constant 352 : index
    %c0_86 = arith.constant 0 : index
    %162 = vector.load %arg2[%c352, %c0_86] : memref<656x66xf32, #tpu.memory_space<vmem>>, vector<1x32xf32>
    %c0_87 = arith.constant 0 : index
    %c0_88 = arith.constant 0 : index
    %163 = vector.load %arg4[%c0_87, %c0_88] : memref<24x32xf32, #tpu.memory_space<vmem>>, vector<17x32xf32>
    %164 = vector.broadcast %162 : vector<1x32xf32> to vector<17x32xf32>
    %165 = arith.mulf %163, %164 : vector<17x32xf32>
    %c353 = arith.constant 353 : index
    %c0_89 = arith.constant 0 : index
    %166 = vector.load %arg2[%c353, %c0_89] : memref<656x66xf32, #tpu.memory_space<vmem>>, vector<1x32xf32>
    %c1_90 = arith.constant 1 : index
    %c0_91 = arith.constant 0 : index
    %167 = vector.load %arg4[%c1_90, %c0_91] : memref<24x32xf32, #tpu.memory_space<vmem>>, vector<17x32xf32>
    %168 = vector.broadcast %166 : vector<1x32xf32> to vector<17x32xf32>
    %169 = arith.mulf %167, %168 : vector<17x32xf32>
    %170 = arith.addf %165, %169 : vector<17x32xf32>
    %c354 = arith.constant 354 : index
    %c0_92 = arith.constant 0 : index
    %171 = vector.load %arg2[%c354, %c0_92] : memref<656x66xf32, #tpu.memory_space<vmem>>, vector<1x32xf32>
    %c2_93 = arith.constant 2 : index
    %c0_94 = arith.constant 0 : index
    %172 = vector.load %arg4[%c2_93, %c0_94] : memref<24x32xf32, #tpu.memory_space<vmem>>, vector<17x32xf32>
    %173 = vector.broadcast %171 : vector<1x32xf32> to vector<17x32xf32>
    %174 = arith.mulf %172, %173 : vector<17x32xf32>
    %175 = arith.addf %170, %174 : vector<17x32xf32>
    %c355 = arith.constant 355 : index
    %c0_95 = arith.constant 0 : index
    %176 = vector.load %arg2[%c355, %c0_95] : memref<656x66xf32, #tpu.memory_space<vmem>>, vector<1x32xf32>
    %c3_96 = arith.constant 3 : index
    %c0_97 = arith.constant 0 : index
    %177 = vector.load %arg4[%c3_96, %c0_97] : memref<24x32xf32, #tpu.memory_space<vmem>>, vector<17x32xf32>
    %178 = vector.broadcast %176 : vector<1x32xf32> to vector<17x32xf32>
    %179 = arith.mulf %177, %178 : vector<17x32xf32>
    %180 = arith.addf %175, %179 : vector<17x32xf32>
    %c356 = arith.constant 356 : index
    %c0_98 = arith.constant 0 : index
    %181 = vector.load %arg2[%c356, %c0_98] : memref<656x66xf32, #tpu.memory_space<vmem>>, vector<1x32xf32>
    %c4_99 = arith.constant 4 : index
    %c0_100 = arith.constant 0 : index
    %182 = vector.load %arg4[%c4_99, %c0_100] : memref<24x32xf32, #tpu.memory_space<vmem>>, vector<17x32xf32>
    %183 = vector.broadcast %181 : vector<1x32xf32> to vector<17x32xf32>
    %184 = arith.mulf %182, %183 : vector<17x32xf32>
    %185 = arith.addf %180, %184 : vector<17x32xf32>
    %c357 = arith.constant 357 : index
    %c0_101 = arith.constant 0 : index
    %186 = vector.load %arg2[%c357, %c0_101] : memref<656x66xf32, #tpu.memory_space<vmem>>, vector<1x32xf32>
    %c5_102 = arith.constant 5 : index
    %c0_103 = arith.constant 0 : index
    %187 = vector.load %arg4[%c5_102, %c0_103] : memref<24x32xf32, #tpu.memory_space<vmem>>, vector<17x32xf32>
    %188 = vector.broadcast %186 : vector<1x32xf32> to vector<17x32xf32>
    %189 = arith.mulf %187, %188 : vector<17x32xf32>
    %190 = arith.addf %185, %189 : vector<17x32xf32>
    %c358 = arith.constant 358 : index
    %c0_104 = arith.constant 0 : index
    %191 = vector.load %arg2[%c358, %c0_104] : memref<656x66xf32, #tpu.memory_space<vmem>>, vector<1x32xf32>
    %c6_105 = arith.constant 6 : index
    %c0_106 = arith.constant 0 : index
    %192 = vector.load %arg4[%c6_105, %c0_106] : memref<24x32xf32, #tpu.memory_space<vmem>>, vector<17x32xf32>
    %193 = vector.broadcast %191 : vector<1x32xf32> to vector<17x32xf32>
    %194 = arith.mulf %192, %193 : vector<17x32xf32>
    %195 = arith.addf %190, %194 : vector<17x32xf32>
    %c629 = arith.constant 629 : index
    %c0_107 = arith.constant 0 : index
    %196 = vector.load %arg2[%c629, %c0_107] : memref<656x66xf32, #tpu.memory_space<vmem>>, vector<1x32xf32>
    %197 = vector.broadcast %196 : vector<1x32xf32> to vector<17x32xf32>
    %198 = arith.addf %195, %197 : vector<17x32xf32>
    %c630 = arith.constant 630 : index
    %c0_108 = arith.constant 0 : index
    %199 = vector.load %arg2[%c630, %c0_108] : memref<656x66xf32, #tpu.memory_space<vmem>>, vector<1x32xf32>
    %c631 = arith.constant 631 : index
    %c0_109 = arith.constant 0 : index
    %200 = vector.load %arg2[%c631, %c0_109] : memref<656x66xf32, #tpu.memory_space<vmem>>, vector<1x32xf32>
    %cst_110 = arith.constant dense<0.000000e+00> : vector<17xf32>
    %201 = vector.multi_reduction <add>, %198, %cst_110 [1] : vector<17x32xf32> to vector<17xf32>
    %202 = vector.shape_cast %201 : vector<17xf32> to vector<17x1xf32>
    %cst_111 = arith.constant 3.200000e+01 : f32
    %203 = vector.broadcast %cst_111 : f32 to vector<17x1xf32>
    %204 = arith.divf %202, %203 : vector<17x1xf32>
    %205 = vector.broadcast %204 : vector<17x1xf32> to vector<17x32xf32>
    %206 = arith.subf %198, %205 : vector<17x32xf32>
    %207 = arith.mulf %206, %206 : vector<17x32xf32>
    %cst_112 = arith.constant dense<0.000000e+00> : vector<17xf32>
    %208 = vector.multi_reduction <add>, %207, %cst_112 [1] : vector<17x32xf32> to vector<17xf32>
    %209 = vector.shape_cast %208 : vector<17xf32> to vector<17x1xf32>
    %cst_113 = arith.constant 3.200000e+01 : f32
    %210 = vector.broadcast %cst_113 : f32 to vector<17x1xf32>
    %211 = arith.divf %209, %210 : vector<17x1xf32>
    %212 = vector.broadcast %204 : vector<17x1xf32> to vector<17x32xf32>
    %213 = arith.subf %198, %212 : vector<17x32xf32>
    %cst_114 = arith.constant 9.99999997E-7 : f32
    %214 = vector.broadcast %cst_114 : f32 to vector<17x1xf32>
    %215 = arith.addf %211, %214 : vector<17x1xf32>
    %216 = math.rsqrt %215 : vector<17x1xf32>
    %217 = vector.broadcast %216 : vector<17x1xf32> to vector<17x32xf32>
    %218 = arith.mulf %213, %217 : vector<17x32xf32>
    %219 = vector.broadcast %199 : vector<1x32xf32> to vector<17x32xf32>
    %220 = arith.mulf %218, %219 : vector<17x32xf32>
    %221 = vector.broadcast %200 : vector<1x32xf32> to vector<17x32xf32>
    %222 = arith.addf %220, %221 : vector<17x32xf32>
    %c392 = arith.constant 392 : index
    %c0_115 = arith.constant 0 : index
    %223 = vector.load %arg2[%c392, %c0_115] : memref<656x66xf32, #tpu.memory_space<vmem>>, vector<32x64xf32>
    %cst_116 = arith.constant dense<0.000000e+00> : vector<17x64xf32>
    %224 = tpu.matmul %222, %223, %cst_116 {dimension_numbers = #tpu.dot_dimension_numbers<[1], [0], [0], [1], [0, 0, 1, 1], [], []>} : vector<17x32xf32>, vector<32x64xf32>, vector<17x64xf32> -> vector<17x64xf32>
    %c632 = arith.constant 632 : index
    %c0_117 = arith.constant 0 : index
    %225 = vector.load %arg2[%c632, %c0_117] : memref<656x66xf32, #tpu.memory_space<vmem>>, vector<1x64xf32>
    %226 = vector.broadcast %225 : vector<1x64xf32> to vector<17x64xf32>
    %227 = arith.addf %224, %226 : vector<17x64xf32>
    %228 = arith.mulf %227, %227 : vector<17x64xf32>
    %229 = arith.mulf %227, %228 : vector<17x64xf32>
    %cst_118 = arith.constant 4.471500e-02 : f32
    %230 = vector.broadcast %cst_118 : f32 to vector<17x64xf32>
    %231 = arith.mulf %230, %229 : vector<17x64xf32>
    %232 = arith.addf %227, %231 : vector<17x64xf32>
    %cst_119 = arith.constant 0.797884583 : f32
    %233 = vector.broadcast %cst_119 : f32 to vector<17x64xf32>
    %234 = arith.mulf %233, %232 : vector<17x64xf32>
    %235 = math.tanh %234 : vector<17x64xf32>
    %cst_120 = arith.constant 1.000000e+00 : f32
    %236 = vector.broadcast %cst_120 : f32 to vector<17x64xf32>
    %237 = arith.addf %236, %235 : vector<17x64xf32>
    %cst_121 = arith.constant 5.000000e-01 : f32
    %238 = vector.broadcast %cst_121 : f32 to vector<17x64xf32>
    %239 = arith.mulf %238, %237 : vector<17x64xf32>
    %240 = arith.mulf %227, %239 : vector<17x64xf32>
    %c488 = arith.constant 488 : index
    %c0_122 = arith.constant 0 : index
    %241 = vector.load %arg2[%c488, %c0_122] : memref<656x66xf32, #tpu.memory_space<vmem>>, vector<64x32xf32>
    %cst_123 = arith.constant dense<0.000000e+00> : vector<17x32xf32>
    %242 = tpu.matmul %240, %241, %cst_123 {dimension_numbers = #tpu.dot_dimension_numbers<[1], [0], [0], [1], [0, 0, 1, 1], [], []>} : vector<17x64xf32>, vector<64x32xf32>, vector<17x32xf32> -> vector<17x32xf32>
    %c633 = arith.constant 633 : index
    %c0_124 = arith.constant 0 : index
    %243 = vector.load %arg2[%c633, %c0_124] : memref<656x66xf32, #tpu.memory_space<vmem>>, vector<1x32xf32>
    %244 = vector.broadcast %243 : vector<1x32xf32> to vector<17x32xf32>
    %245 = arith.addf %242, %244 : vector<17x32xf32>
    %c634 = arith.constant 634 : index
    %c0_125 = arith.constant 0 : index
    %246 = vector.load %arg2[%c634, %c0_125] : memref<656x66xf32, #tpu.memory_space<vmem>>, vector<1x32xf32>
    %247 = vector.broadcast %246 : vector<1x32xf32> to vector<17x32xf32>
    %248 = arith.mulf %247, %245 : vector<17x32xf32>
    %249 = arith.addf %160, %248 : vector<17x32xf32>
    %c619 = arith.constant 619 : index
    %c0_126 = arith.constant 0 : index
    %250 = vector.load %arg2[%c619, %c0_126] : memref<656x66xf32, #tpu.memory_space<vmem>>, vector<1x32xf32>
    %c620 = arith.constant 620 : index
    %c0_127 = arith.constant 0 : index
    %251 = vector.load %arg2[%c620, %c0_127] : memref<656x66xf32, #tpu.memory_space<vmem>>, vector<1x32xf32>
    %cst_128 = arith.constant dense<0.000000e+00> : vector<17xf32>
    %252 = vector.multi_reduction <add>, %249, %cst_128 [1] : vector<17x32xf32> to vector<17xf32>
    %253 = vector.shape_cast %252 : vector<17xf32> to vector<17x1xf32>
    %cst_129 = arith.constant 3.200000e+01 : f32
    %254 = vector.broadcast %cst_129 : f32 to vector<17x1xf32>
    %255 = arith.divf %253, %254 : vector<17x1xf32>
    %256 = vector.broadcast %255 : vector<17x1xf32> to vector<17x32xf32>
    %257 = arith.subf %249, %256 : vector<17x32xf32>
    %258 = arith.mulf %257, %257 : vector<17x32xf32>
    %cst_130 = arith.constant dense<0.000000e+00> : vector<17xf32>
    %259 = vector.multi_reduction <add>, %258, %cst_130 [1] : vector<17x32xf32> to vector<17xf32>
    %260 = vector.shape_cast %259 : vector<17xf32> to vector<17x1xf32>
    %cst_131 = arith.constant 3.200000e+01 : f32
    %261 = vector.broadcast %cst_131 : f32 to vector<17x1xf32>
    %262 = arith.divf %260, %261 : vector<17x1xf32>
    %263 = vector.broadcast %255 : vector<17x1xf32> to vector<17x32xf32>
    %264 = arith.subf %249, %263 : vector<17x32xf32>
    %cst_132 = arith.constant 9.99999997E-7 : f32
    %265 = vector.broadcast %cst_132 : f32 to vector<17x1xf32>
    %266 = arith.addf %262, %265 : vector<17x1xf32>
    %267 = math.rsqrt %266 : vector<17x1xf32>
    %268 = vector.broadcast %267 : vector<17x1xf32> to vector<17x32xf32>
    %269 = arith.mulf %264, %268 : vector<17x32xf32>
    %270 = vector.broadcast %250 : vector<1x32xf32> to vector<17x32xf32>
    %271 = arith.mulf %269, %270 : vector<17x32xf32>
    %272 = vector.broadcast %251 : vector<1x32xf32> to vector<17x32xf32>
    %273 = arith.addf %271, %272 : vector<17x32xf32>
    %c552 = arith.constant 552 : index
    %c0_133 = arith.constant 0 : index
    %274 = vector.load %arg2[%c552, %c0_133] : memref<656x66xf32, #tpu.memory_space<vmem>>, vector<32x66xf32>
    %cst_134 = arith.constant dense<0.000000e+00> : vector<17x66xf32>
    %275 = tpu.matmul %273, %274, %cst_134 {dimension_numbers = #tpu.dot_dimension_numbers<[1], [0], [0], [1], [0, 0, 1, 1], [], []>} : vector<17x32xf32>, vector<32x66xf32>, vector<17x66xf32> -> vector<17x66xf32>
    %c621 = arith.constant 621 : index
    %c0_135 = arith.constant 0 : index
    %276 = vector.load %arg2[%c621, %c0_135] : memref<656x66xf32, #tpu.memory_space<vmem>>, vector<1x66xf32>
    %277 = vector.broadcast %276 : vector<1x66xf32> to vector<17x66xf32>
    %278 = arith.addf %275, %277 : vector<17x66xf32>
    %c584 = arith.constant 584 : index
    %c0_136 = arith.constant 0 : index
    %279 = vector.load %arg2[%c584, %c0_136] : memref<656x66xf32, #tpu.memory_space<vmem>>, vector<32x66xf32>
    %cst_137 = arith.constant dense<0.000000e+00> : vector<17x66xf32>
    %280 = tpu.matmul %273, %279, %cst_137 {dimension_numbers = #tpu.dot_dimension_numbers<[1], [0], [0], [1], [0, 0, 1, 1], [], []>} : vector<17x32xf32>, vector<32x66xf32>, vector<17x66xf32> -> vector<17x66xf32>
    %c622 = arith.constant 622 : index
    %c0_138 = arith.constant 0 : index
    %281 = vector.load %arg2[%c622, %c0_138] : memref<656x66xf32, #tpu.memory_space<vmem>>, vector<1x66xf32>
    %282 = vector.broadcast %281 : vector<1x66xf32> to vector<17x66xf32>
    %283 = arith.addf %280, %282 : vector<17x66xf32>
    %284 = math.exp %278 : vector<17x66xf32>
    %cst_139 = arith.constant 1.000000e+02 : f32
    %285 = vector.broadcast %cst_139 : f32 to vector<17x66xf32>
    %286 = arith.minimumf %284, %285 : vector<17x66xf32>
    %287 = math.cos %283 : vector<17x66xf32>
    %288 = arith.mulf %286, %287 : vector<17x66xf32>
    %c104 = arith.constant 104 : index
    %c0_140 = arith.constant 0 : index
    %289 = vector.load %arg2[%c104, %c0_140] : memref<656x66xf32, #tpu.memory_space<vmem>>, vector<66x64xf32>
    %cst_141 = arith.constant dense<0.000000e+00> : vector<17x64xf32>
    %290 = tpu.matmul %288, %289, %cst_141 {dimension_numbers = #tpu.dot_dimension_numbers<[1], [0], [0], [1], [0, 0, 1, 1], [], []>} : vector<17x66xf32>, vector<66x64xf32>, vector<17x64xf32> -> vector<17x64xf32>
    %cst_142 = arith.constant 0.000000e+00 : f32
    %291 = vector.broadcast %cst_142 : f32 to vector<24x16xf32>
    %c0_143 = arith.constant 0 : index
    %c0_144 = arith.constant 0 : index
    %292 = vector.load %arg5[%c0_143, %c0_144] : memref<24x16xf32, #tpu.memory_space<vmem>>, vector<24x16xf32>
    tpu.vector_store %arg5[%c0_143, %c0_144], %291 {strides = array<i32>} : memref<24x16xf32, #tpu.memory_space<vmem>>, vector<24x16xf32>,
    %c0_145 = arith.constant 0 : index
    %c0_146 = arith.constant 0 : index
    %293 = vector.load %arg5[%c0_145, %c0_146] : memref<24x16xf32, #tpu.memory_space<vmem>>, vector<17x16xf32>
    %294 = vector.extract_strided_slice %290 {offsets = [0, 0], sizes = [17, 16], strides = [1, 1]} : vector<17x64xf32> to vector<17x16xf32>
    %295 = arith.addf %293, %294 : vector<17x16xf32>
    %c0_147 = arith.constant 0 : index
    %c0_148 = arith.constant 0 : index
    %296 = vector.load %arg5[%c0_147, %c0_148] : memref<24x16xf32, #tpu.memory_space<vmem>>, vector<17x16xf32>
    tpu.vector_store %arg5[%c0_147, %c0_148], %295 {strides = array<i32>} : memref<24x16xf32, #tpu.memory_space<vmem>>, vector<17x16xf32>,
    %c1_149 = arith.constant 1 : index
    %c0_150 = arith.constant 0 : index
    %297 = vector.load %arg5[%c1_149, %c0_150] : memref<24x16xf32, #tpu.memory_space<vmem>>, vector<17x16xf32>
    %298 = vector.extract_strided_slice %290 {offsets = [0, 16], sizes = [17, 16], strides = [1, 1]} : vector<17x64xf32> to vector<17x16xf32>
    %299 = arith.addf %297, %298 : vector<17x16xf32>
    %c1_151 = arith.constant 1 : index
    %c0_152 = arith.constant 0 : index
    %300 = vector.load %arg5[%c1_151, %c0_152] : memref<24x16xf32, #tpu.memory_space<vmem>>, vector<17x16xf32>
    tpu.vector_store %arg5[%c1_151, %c0_152], %299 {strides = array<i32>} : memref<24x16xf32, #tpu.memory_space<vmem>>, vector<17x16xf32>,
    %c2_153 = arith.constant 2 : index
    %c0_154 = arith.constant 0 : index
    %301 = vector.load %arg5[%c2_153, %c0_154] : memref<24x16xf32, #tpu.memory_space<vmem>>, vector<17x16xf32>
    %302 = vector.extract_strided_slice %290 {offsets = [0, 32], sizes = [17, 16], strides = [1, 1]} : vector<17x64xf32> to vector<17x16xf32>
    %303 = arith.addf %301, %302 : vector<17x16xf32>
    %c2_155 = arith.constant 2 : index
    %c0_156 = arith.constant 0 : index
    %304 = vector.load %arg5[%c2_155, %c0_156] : memref<24x16xf32, #tpu.memory_space<vmem>>, vector<17x16xf32>
    tpu.vector_store %arg5[%c2_155, %c0_156], %303 {strides = array<i32>} : memref<24x16xf32, #tpu.memory_space<vmem>>, vector<17x16xf32>,
    %c3_157 = arith.constant 3 : index
    %c0_158 = arith.constant 0 : index
    %305 = vector.load %arg5[%c3_157, %c0_158] : memref<24x16xf32, #tpu.memory_space<vmem>>, vector<17x16xf32>
    %306 = vector.extract_strided_slice %290 {offsets = [0, 48], sizes = [17, 16], strides = [1, 1]} : vector<17x64xf32> to vector<17x16xf32>
    %307 = arith.addf %305, %306 : vector<17x16xf32>
    %c3_159 = arith.constant 3 : index
    %c0_160 = arith.constant 0 : index
    %308 = vector.load %arg5[%c3_159, %c0_160] : memref<24x16xf32, #tpu.memory_space<vmem>>, vector<17x16xf32>
    tpu.vector_store %arg5[%c3_159, %c0_160], %307 {strides = array<i32>} : memref<24x16xf32, #tpu.memory_space<vmem>>, vector<17x16xf32>,
    %c640 = arith.constant 640 : index
    %c0_161 = arith.constant 0 : index
    %309 = vector.load %arg2[%c640, %c0_161] : memref<656x66xf32, #tpu.memory_space<vmem>>, vector<16x16xf32>
    %c2_162 = arith.constant 2 : index
    %c0_163 = arith.constant 0 : index
    %310 = vector.load %arg5[%c2_162, %c0_163] : memref<24x16xf32, #tpu.memory_space<vmem>>, vector<16x16xf32>
    %311 = arith.mulf %310, %309 : vector<16x16xf32>
    %c0_164 = arith.constant 0 : index
    %c0_165 = arith.constant 0 : index
    %c0_166 = arith.constant 0 : index
    %312 = vector.load %arg3[%c0_164, %c0_165, %c0_166] : memref<1x16x16xf32, #tpu.memory_space<vmem>>, vector<1x16x16xf32>
    %313 = vector.shape_cast %312 : vector<1x16x16xf32> to vector<16x16xf32>
    %314 = vector.shape_cast %311 : vector<16x16xf32> to vector<1x16x16xf32>
    tpu.vector_store %arg3[%c0_164, %c0_165, %c0_166], %314 {strides = array<i32>} : memref<1x16x16xf32, #tpu.memory_space<vmem>>, vector<1x16x16xf32>,
    return
  }
  func.func @transform_0(%arg0: i32) -> (i32, i32, i32) {
    %c0_i32 = arith.constant 0 : i32
    %c0_i32_0 = arith.constant 0 : i32
    %c0_i32_1 = arith.constant 0 : i32
    return %arg0, %c0_i32, %c0_i32_0 : i32, i32, i32
  }
  func.func @transform_1(%arg0: i32) -> (i32, i32) {
    %c0_i32 = arith.constant 0 : i32
    %c0_i32_0 = arith.constant 0 : i32
    %c0_i32_1 = arith.constant 0 : i32
    return %c0_i32, %c0_i32_0 : i32, i32
  }
  func.func @transform_2(%arg0: i32) -> (i32, i32, i32) {
    %c0_i32 = arith.constant 0 : i32
    %c0_i32_0 = arith.constant 0 : i32
    %c0_i32_1 = arith.constant 0 : i32
    return %arg0, %c0_i32, %c0_i32_0 : i32, i32, i32
  }
}

</mosaic_0001>

<llo_original>
// kernel: vocos_forward.1
$region0: #{vocos_forward.1}
  #allocation0 [shape = 'u32[]', space=smem, size = 0x4, offset = 0x4, fixed_abs, tag = 'smem constant byte address 0x4 - core index']
  #allocation1 [shape = 'u32[72,128]{1,0:T(1,128)}', space=vmem, size = 0x9000, scoped, tag = 'internal scratch']
  #allocation2 [shape = 'f32[24,32]{1,0:T(8,128)}', space=vmem, size = 0x3000, scoped, tag = 'scratch operand']
  #allocation3 [shape = 'f32[24,16]{1,0:T(8,128)}', space=vmem, size = 0x3000, scoped, tag = 'scratch operand']
  %s0 = inlined_call_operand.vmem [shape: f32[2,17,64], index: 0, kind: input, shape index: {}]
  %s1 = inlined_call_operand.vmem [shape: f32[656,66], index: 1, kind: input, shape index: {}]
  %s2 = inlined_call_operand.vmem [shape: f32[2,16,16], index: 2, kind: output, shape index: {}]
  %s3 = sld [smem:[#allocation0]]
  $region41: #{vocos_forward.1} parent=0
    _
  %s5 = ssub.s32 1, %s3
  %s6 = scalar_select 0, %s5, %s3
  loop: start=0, step=1, limit=4
  $region2: #{vocos_forward.1} parent=0 // loop_pre_header
    _
  $region3: #{vocos_forward.1} parent=0 // loop_header
    %s8 = sphi 0, %s12
    %p9 = scmp.ge.s32.totalorder %s8, 4
    %s18 = sphi 0, %s20
    %s21 = sphi 0, %s18
    %s22 = sphi 0, %s21
    %s38 = sphi 0, %s22
    %s42 = sphi 0, %s42
    %s44 = sphi 0, %s42
    %s45 = sphi 0, %s44
    %s59 = sphi 0, %s45
    %s65 = sphi 0, %s67
    %s68 = sphi 0, %s65
    %s69 = sphi 0, %s68
    %s85 = sphi 0, %s69
  $region4: #{vocos_forward.1} parent=0 // loop_header_branch
    %11 = sbr.rel (%p9) target = $region8
  $region5: #{vocos_forward.1} parent=0 // loop_body
    %s13 = ssub.s32 %s8, 1
    %s14 = ssub.s32 %s8, 2
    %s15 = sadd.s32 %s8, 1
    %s16 = ssub.s32 %s8, %s15
    %p17 = scmp.eq.s32.totalorder %s16, 0
    %s19 = sadd.s32 %s18, 1
    %s20 = scalar_select %p17, %s18, %s19
    %p23 = pneg %p17
    %p24 = scmp.eq.s32.totalorder %s8, 1
    %p25 = por %p23, %p24
    %p26 = scmp.ne.s32.totalorder %s18, %s21
    %p27 = scmp.eq.s32.totalorder %s8, 0
    %p28 = por %p26, %p27
    %p29 = scmp.ne.s32.totalorder %s18, %s21
    %p30 = scmp.eq.s32.totalorder %s13, 1
    %p31 = por %p29, %p30
    %p32 = scmp.ne.s32.totalorder %s21, %s22
    %p33 = scmp.eq.s32.totalorder %s13, 0
    %p34 = por %p32, %p33
    %p35 = scmp.ne.s32.totalorder %s21, %s22
    %p36 = scmp.eq.s32.totalorder %s14, 1
    %p37 = por %p35, %p36
    %p39 = scmp.ne.s32.totalorder %s22, %s38
    %p40 = scmp.eq.s32.totalorder %s14, 0
    %p41 = por %p39, %p40
    %s43 = sadd.s32 %s42, 1
    %p46 = scmp.eq.s32.totalorder %s8, 1
    %p47 = scmp.ne.s32.totalorder %s42, %s44
    %p48 = scmp.eq.s32.totalorder %s8, 0
    %p49 = por %p47, %p48
    %p50 = scmp.ne.s32.totalorder %s42, %s44
    %p51 = scmp.eq.s32.totalorder %s13, 1
    %p52 = por %p50, %p51
    %p53 = scmp.ne.s32.totalorder %s44, %s45
    %p54 = scmp.eq.s32.totalorder %s13, 0
    %p55 = por %p53, %p54
    %p56 = scmp.ne.s32.totalorder %s44, %s45
    %p57 = scmp.eq.s32.totalorder %s14, 1
    %p58 = por %p56, %p57
    %p60 = scmp.ne.s32.totalorder %s45, %s59
    %p61 = scmp.eq.s32.totalorder %s14, 0
    %p62 = por %p60, %p61
    %s63 = ssub.s32 %s8, %s15
    %p64 = scmp.eq.s32.totalorder %s63, 0
    %s66 = sadd.s32 %s65, 1
    %s67 = scalar_select %p64, %s65, %s66
    %p70 = pneg %p64
    %p71 = scmp.eq.s32.totalorder %s8, 1
    %p72 = por %p70, %p71
    %p73 = scmp.ne.s32.totalorder %s65, %s68
    %p74 = scmp.eq.s32.totalorder %s8, 0
    %p75 = por %p73, %p74
    %p76 = scmp.ne.s32.totalorder %s65, %s68
    %p77 = scmp.eq.s32.totalorder %s13, 1
    %p78 = por %p76, %p77
    %p79 = scmp.ne.s32.totalorder %s68, %s69
    %p80 = scmp.eq.s32.totalorder %s13, 0
    %p81 = por %p79, %p80
    %p82 = scmp.ne.s32.totalorder %s68, %s69
    %p83 = scmp.eq.s32.totalorder %s14, 1
    %p84 = por %p82, %p83
    %p86 = scmp.ne.s32.totalorder %s69, %s85
    %p87 = scmp.eq.s32.totalorder %s14, 0
    %p88 = por %p86, %p87
    %p89 = scmp.le.s32.totalorder 1, %s8
    %p90 = scmp.lt.s32.totalorder %s8, 3
    %p91 = pnand %p89, %p90
    %p92 = pneg %p91
    // Predicated region
    $region9: #{vocos_forward.1} parent=5 // pred_check
      _
    $region10: #{vocos_forward.1} parent=5 // pred_check_branch
      %94 = sbr.rel (%p91) target = $region12
    $region11: #{vocos_forward.1} parent=5 // pred_region
      %s95 = ssub.s32 %s8, 1
      // Predicated region
      $region13: #{vocos_forward.1} parent=11 // pred_check
        %p96 = pneg %p55
      $region14: #{vocos_forward.1} parent=11 // pred_check_branch
        %98 = sbr.rel (%p96) target = $region16
      $region15: #{vocos_forward.1} parent=11 // pred_region
        _
      $region16: #{vocos_forward.1} parent=11 // pred_fallthru
        _
    $region12: #{vocos_forward.1} parent=5 // pred_fallthru
      _
    %p99 = scmp.lt.s32.totalorder %s8, 2
    // Predicated region
    $region17: #{vocos_forward.1} parent=5 // pred_check
      %p100 = pneg %p99
    $region18: #{vocos_forward.1} parent=5 // pred_check_branch
      %102 = sbr.rel (%p100) target = $region20
    $region19: #{vocos_forward.1} parent=5 // pred_region
      // Predicated region
      $region21: #{vocos_forward.1} parent=19 // pred_check
        %p103 = pneg %p28
      $region22: #{vocos_forward.1} parent=19 // pred_check_branch
        %105 = sbr.rel (%p103) target = $region24
      $region23: #{vocos_forward.1} parent=19 // pred_region
        %p106 = scmp.lt.s32.totalorder %s8, 1
        %s107 = scalar_select %p106, %s8, 1
        %s108 = smul.addr %s107, 3
        %s109 = smul.addr %s108, 8
        %s110 = scalar_lea.vmem %s0, %s109
      $region24: #{vocos_forward.1} parent=19 // pred_fallthru
        _
    $region20: #{vocos_forward.1} parent=5 // pred_fallthru
      _
    %p111 = scmp.le.s32.totalorder 1, %s8
    %p112 = scmp.lt.s32.totalorder %s8, 3
    %p113 = pnand %p111, %p112
    %p114 = pneg %p113
    // Predicated region
    $region25: #{vocos_forward.1} parent=5 // pred_check
      _
    $region26: #{vocos_forward.1} parent=5 // pred_check_branch
      %116 = sbr.rel (%p113) target = $region28
    $region27: #{vocos_forward.1} parent=5 // pred_region
      %s117 = ssub.s32 %s8, 1
      %p118 = scmp.lt.s32.totalorder %s13, 1
      %s119 = scalar_select %p118, %s13, 1
      %s120 = smul.addr %s119, 3
      %s121 = smul.addr %s120, 8
      %s122 = scalar_lea.vmem %s0, %s121
      %p123 = pneg %p34
      %p124 = pneg %p31
      %p125 = pneg %p55
      %p126 = pneg %p52
      %p127 = pneg %p81
      %p128 = pneg %p78
      %p129 = scmp.lt.s32.totalorder %s13, 1
      %s130 = scalar_select %p129, %s13, 1
      %s131 = smul.addr %s130, 2
      %s132 = smul.addr %s131, 8
      %s133 = scalar_lea.vmem %s2, %s132
      %p134 = scmp.lt.s32.totalorder %s13, 1
      %s135 = scalar_select %p134, %s13, 1
      %s136 = smul.addr %s135, 3
      %s137 = smul.addr %s136, 8
      %s138 = scalar_lea.vmem %s0, %s137
      %p139 = scmp.lt.s32.totalorder %s13, 1
      %s140 = scalar_select %p139, %s13, 1
      %s141 = smul.addr %s140, 2
      %s142 = smul.addr %s141, 8
      %s143 = scalar_lea.vmem %s2, %s142
      %v144 = vld [vmem:[%s138] sm:$0xff]
      %v145 = vld [vmem:[%s138 + $0x8] sm:$0xff]
      %v146 = vld [vmem:[%s138 + $0x10] sm:$0x1]
      %v147 = vld [vmem:[%s1] sm:$0xff]
      %v148 = vld [vmem:[%s1 + $0x8] sm:$0xff]
      %v149 = vld [vmem:[%s1 + $0x10] sm:$0xff]
      %v150 = vld [vmem:[%s1 + $0x18] sm:$0xff]
      %v151 = vld [vmem:[%s1 + $0x20] sm:$0xff]
      %v152 = vld [vmem:[%s1 + $0x28] sm:$0xff]
      %v153 = vld [vmem:[%s1 + $0x30] sm:$0xff]
      %v154 = vld [vmem:[%s1 + $0x38] sm:$0xff]
      %vm155 = vcmask 523264
      %v157 = vsel %vm155, %v144, 0
      %v160 = vsel %vm155, %v145, 0
      %v163 = vsel %vm155, %v146, 0
      %165 = vmatpush.msra.mxu0 0.0
      %166 = vmatpush.msra.mxu0 0.0
      %167 = vmatpush.msra.mxu0 0.0
      %168 = vmatpush.msra.mxu0 0.0
      %169 = vmatpush.msra.mxu0 0.0
      %170 = vmatpush.msra.mxu0 0.0
      %171 = vmatpush.msra.mxu0 0.0
      %172 = vmatpush.msra.mxu0 0.0
      %173 = vmatpush.msra.mxu0 %v154
      %174 = vmatpush.msra.mxu0 %v153
      %175 = vmatpush.msra.mxu0 %v152
      %176 = vmatpush.msra.mxu0 %v151
      %177 = vmatpush.msra.mxu0 %v150
      %178 = vmatpush.msra.mxu0 %v149
      %179 = vmatpush.msra.mxu0 %v148
      %180 = vmatpush.msra.mxu0 %v147
      %181 = vmatmul.f32.gmra.mxu0 %v157
      %v182 = vpop.f32.mrf.mxu0
      %v183 = vadd.f32 0.0, %v182
      %184 = vmatmul.f32.gmra.mxu0 %v160
      %v185 = vpop.f32.mrf.mxu0
      %v186 = vadd.f32 0.0, %v185
      %187 = vmatmul.f32.gmra.mxu0 %v163
      %v188 = vpop.f32.mrf.mxu0
      %v189 = vadd.f32 0.0, %v188
      %190 = vdwg.mxu0
      %v191 = vmul.f32 %v183, %v183
      %v192 = vmul.f32 %v186, %v186
      %v193 = vmul.f32 %v189, %v189
      %197 = vrot.lane.b32.xlu0 %v191, 95
      %v198 = vpop.permute.xlu0 %197
      %199 = vrot.lane.b32.xlu0 %v192, 95
      %v200 = vpop.permute.xlu0 %199
      %201 = vrot.lane.b32.xlu0 %v193, 95
      %v202 = vpop.permute.xlu0 %201
      %v206 = vadd.f32 %v191, %v198
      %v207 = vadd.f32 %v192, %v200
      %v208 = vadd.f32 %v193, %v202
      %v209 = vrsqrt.pop %v206
      %v210 = vmul.f32 %v209, %v206
      %v211 = vmul.f32 %v210, %v209
      %v212 = vmul.f32 0.5, %v211
      %v213 = vsub.f32 1.5, %v212
      %v214 = vmul.f32 %v209, %v213
      %v215 = vmul.f32 %v206, %v214
      %vm216 = vcmp.eq.f32.partialorder %v206, inf
      %v217 = vsel %vm216, %v206, %v215
      %vm218 = vcmp.eq.f32.partialorder %v206, 0.0
      %v219 = vand.u32 %v206, 2147483648
      %v220 = vsel %vm218, %v219, %v217
      %v221 = vrsqrt.pop %v207
      %v222 = vmul.f32 %v221, %v207
      %v223 = vmul.f32 %v222, %v221
      %v224 = vmul.f32 0.5, %v223
      %v225 = vsub.f32 1.5, %v224
      %v226 = vmul.f32 %v221, %v225
      %v227 = vmul.f32 %v207, %v226
      %vm228 = vcmp.eq.f32.partialorder %v207, inf
      %v229 = vsel %vm228, %v207, %v227
      %vm230 = vcmp.eq.f32.partialorder %v207, 0.0
      %v231 = vand.u32 %v207, 2147483648
      %v232 = vsel %vm230, %v231, %v229
      %v233 = vrsqrt.pop %v208
      %v234 = vmul.f32 %v233, %v208
      %v235 = vmul.f32 %v234, %v233
      %v236 = vmul.f32 0.5, %v235
      %v237 = vsub.f32 1.5, %v236
      %v238 = vmul.f32 %v233, %v237
      %v239 = vmul.f32 %v208, %v238
      %vm240 = vcmp.eq.f32.partialorder %v208, inf
      %v241 = vsel %vm240, %v208, %v239
      %vm242 = vcmp.eq.f32.partialorder %v208, 0.0
      %v243 = vand.u32 %v208, 2147483648
      %v244 = vsel %vm242, %v243, %v241
      %v245 = vld [vmem:[%s1 + $0x40] sm:$0xff]
      %v246 = vld [vmem:[%s1 + $0x48] sm:$0xff]
      %v247 = vld [vmem:[%s1 + $0x50] sm:$0xff]
      %v248 = vld [vmem:[%s1 + $0x58] sm:$0xff]
      %v249 = vld [vmem:[%s1 + $0x60] sm:$0x1]
      %vm250 = vcmask 269312
      %v252 = vsel %vm250, %v220, 0
      %v255 = vsel %vm250, %v232, 0
      %v258 = vsel %vm250, %v244, 0
      %vm260 = vcmask 1040384
      %v262 = vsel %vm260, %v249, 0
      %264 = vmatpush.msra.mxu0 0.0
      %265 = vmatpush.msra.mxu0 0.0
      %266 = vmatpush.msra.mxu0 0.0
      %267 = vmatpush.msra.mxu0 0.0
      %268 = vmatpush.msra.mxu0 0.0
      %269 = vmatpush.msra.mxu0 0.0
      %270 = vmatpush.msra.mxu0 0.0
      %271 = vmatpush.msra.mxu0 0.0
      %272 = vmatpush.msra.mxu0 0.0
      %273 = vmatpush.msra.mxu0 0.0
      %274 = vmatpush.msra.mxu0 0.0
      %275 = vmatpush.msra.mxu0 %v262
      %276 = vmatpush.msra.mxu0 %v248
      %277 = vmatpush.msra.mxu0 %v247
      %278 = vmatpush.msra.mxu0 %v246
      %279 = vmatpush.msra.mxu0 %v245
      %280 = vmatmul.f32.gmra.mxu0 %v252
      %v281 = vpop.f32.mrf.mxu0
      %v282 = vadd.f32 0.0, %v281
      %283 = vmatmul.f32.gmra.mxu0 %v255
      %v284 = vpop.f32.mrf.mxu0
      %v285 = vadd.f32 0.0, %v284
      %286 = vmatmul.f32.gmra.mxu0 %v258
      %v287 = vpop.f32.mrf.mxu0
      %v288 = vadd.f32 0.0, %v287
      %289 = vdwg.mxu0
      %v290 = vmax.f32 %v282, 1e-07
      %v291 = vmax.f32 %v285, 1e-07
      %v292 = vmax.f32 %v288, 1e-07
      %v293 = vlog2.pop %v290
      %v294 = vmul.f32 %v293, 0.6931472
      %v295 = vlog2.pop %v291
      %v296 = vmul.f32 %v295, 0.6931472
      %v297 = vlog2.pop %v292
      %v298 = vmul.f32 %v297, 0.6931472
      %vm299 = vcmask 261120
      %300 = vst.msk [vmem:[#allocation2] sm:$0xff] %vm299, 0.0
      %301 = vst.msk [vmem:[#allocation2 + $0x8] sm:$0xff] %vm299, 0.0
      %302 = vst.msk [vmem:[#allocation2 + $0x10] sm:$0xff] %vm299, 0.0
      %vm303 = vcmask 195584
      %304 = vst.msk [vmem:[#allocation2 + $0x3] sm:$0xff] %vm303, %v294
      %305 = vst.msk [vmem:[#allocation2 + $0xb] sm:$0xff] %vm303, %v296
      %vm306 = vcmask 188416
      %307 = vst.msk [vmem:[#allocation2 + $0x13] sm:$0x1] %vm306, %v298
      %v308 = vld [vmem:[%s1 + $0xb0] sm:$0xff]
      %v309 = vld [vmem:[%s1 + $0xb8] sm:$0xff]
      %v310 = vld [vmem:[%s1 + $0xc0] sm:$0xff]
      %v311 = vld [vmem:[#allocation2] sm:$0xff]
      %v312 = vld [vmem:[#allocation2 + $0x8] sm:$0xff]
      %v313 = vld [vmem:[#allocation2 + $0x10] sm:$0x1]
      %v314 = vld [vmem:[%s1 + $0xc8] sm:$0xff]
      %v315 = vld [vmem:[%s1 + $0xd0] sm:$0xff]
      %v316 = vld [vmem:[%s1 + $0xd8] sm:$0xff]
      %v317 = vld [vmem:[#allocation2 + $0x1] sm:$0xff]
      %v318 = vld [vmem:[#allocation2 + $0x9] sm:$0xff]
      %v319 = vld [vmem:[#allocation2 + $0x11] sm:$0x1]
      %v321 = vsel %vm303, %v317, 0
      %v324 = vsel %vm303, %v318, 0
      %v327 = vsel %vm303, %v319, 0
      %329 = vmatpush.msra.mxu0 0.0
      %330 = vmatpush.msra.mxu0 0.0
      %331 = vmatpush.msra.mxu0 0.0
      %332 = vmatpush.msra.mxu0 0.0
      %333 = vmatpush.msra.mxu0 0.0
      %334 = vmatpush.msra.mxu0 0.0
      %335 = vmatpush.msra.mxu0 0.0
      %336 = vmatpush.msra.mxu0 0.0
      %337 = vmatpush.msra.mxu0 0.0
      %338 = vmatpush.msra.mxu0 0.0
      %339 = vmatpush.msra.mxu0 0.0
      %340 = vmatpush.msra.mxu0 0.0
      %341 = vmatpush.msra.mxu0 0.0
      %342 = vmatpush.msra.mxu0 %v316
      %343 = vmatpush.msra.mxu0 %v315
      %344 = vmatpush.msra.mxu0 %v314
      %345 = vmatmul.f32.gmra.mxu0 %v321
      %v346 = vpop.f32.mrf.mxu0
      %v347 = vadd.f32 0.0, %v346
      %348 = vmatmul.f32.gmra.mxu0 %v324
      %v349 = vpop.f32.mrf.mxu0
      %v350 = vadd.f32 0.0, %v349
      %351 = vmatmul.f32.gmra.mxu0 %v327
      %v352 = vpop.f32.mrf.mxu0
      %v353 = vadd.f32 0.0, %v352
      %354 = vdwg.mxu0
      %v356 = vsel %vm303, %v311, 0
      %v359 = vsel %vm303, %v312, 0
      %v362 = vsel %vm303, %v313, 0
      %364 = vmatpush.msra.mxu0 0.0
      %365 = vmatpush.msra.mxu0 0.0
      %366 = vmatpush.msra.mxu0 0.0
      %367 = vmatpush.msra.mxu0 0.0
      %368 = vmatpush.msra.mxu0 0.0
      %369 = vmatpush.msra.mxu0 0.0
      %370 = vmatpush.msra.mxu0 0.0
      %371 = vmatpush.msra.mxu0 0.0
      %372 = vmatpush.msra.mxu0 0.0
      %373 = vmatpush.msra.mxu0 0.0
      %374 = vmatpush.msra.mxu0 0.0
      %375 = vmatpush.msra.mxu0 0.0
      %376 = vmatpush.msra.mxu0 0.0
      %377 = vmatpush.msra.mxu0 %v310
      %378 = vmatpush.msra.mxu0 %v309
      %379 = vmatpush.msra.mxu0 %v308
      %380 = vmatmul.f32.gmra.mxu0 %v356
      %v381 = vpop.f32.mrf.mxu0
      %v382 = vadd.f32 %v347, %v381
      %383 = vmatmul.f32.gmra.mxu0 %v359
      %v384 = vpop.f32.mrf.mxu0
      %v385 = vadd.f32 %v350, %v384
      %386 = vmatmul.f32.gmra.mxu0 %v362
      %v387 = vpop.f32.mrf.mxu0
      %v388 = vadd.f32 %v353, %v387
      %389 = vdwg.mxu0
      %v390 = vld [vmem:[%s1 + $0xe0] sm:$0xff]
      %v391 = vld [vmem:[%s1 + $0xe8] sm:$0xff]
      %v392 = vld [vmem:[%s1 + $0xf0] sm:$0xff]
      %v393 = vld [vmem:[#allocation2 + $0x2] sm:$0xff]
      %v394 = vld [vmem:[#allocation2 + $0xa] sm:$0xff]
      %v395 = vld [vmem:[#allocation2 + $0x12] sm:$0x1]
      %v397 = vsel %vm303, %v393, 0
      %v400 = vsel %vm303, %v394, 0
      %v403 = vsel %vm303, %v395, 0
      %405 = vmatpush.msra.mxu0 0.0
      %406 = vmatpush.msra.mxu0 0.0
      %407 = vmatpush.msra.mxu0 0.0
      %408 = vmatpush.msra.mxu0 0.0
      %409 = vmatpush.msra.mxu0 0.0
      %410 = vmatpush.msra.mxu0 0.0
      %411 = vmatpush.msra.mxu0 0.0
      %412 = vmatpush.msra.mxu0 0.0
      %413 = vmatpush.msra.mxu0 0.0
      %414 = vmatpush.msra.mxu0 0.0
      %415 = vmatpush.msra.mxu0 0.0
      %416 = vmatpush.msra.mxu0 0.0
      %417 = vmatpush.msra.mxu0 0.0
      %418 = vmatpush.msra.mxu0 %v392
      %419 = vmatpush.msra.mxu0 %v391
      %420 = vmatpush.msra.mxu0 %v390
      %421 = vmatmul.f32.gmra.mxu0 %v397
      %v422 = vpop.f32.mrf.mxu0
      %v423 = vadd.f32 0.0, %v422
      %424 = vmatmul.f32.gmra.mxu0 %v400
      %v425 = vpop.f32.mrf.mxu0
      %v426 = vadd.f32 0.0, %v425
      %427 = vmatmul.f32.gmra.mxu0 %v403
      %v428 = vpop.f32.mrf.mxu0
      %v429 = vadd.f32 0.0, %v428
      %430 = vdwg.mxu0
      %v431 = vadd.f32 %v382, %v423
      %v432 = vadd.f32 %v385, %v426
      %v433 = vadd.f32 %v388, %v429
      %v434 = vld [vmem:[%s1 + $0xf8] sm:$0xff]
      %v435 = vld [vmem:[%s1 + $0x100] sm:$0xff]
      %v436 = vld [vmem:[%s1 + $0x108] sm:$0xff]
      %v437 = vld [vmem:[#allocation2 + $0x3] sm:$0xff]
      %v438 = vld [vmem:[#allocation2 + $0xb] sm:$0xff]
      %v439 = vld [vmem:[#allocation2 + $0x13] sm:$0x1]
      %v441 = vsel %vm303, %v437, 0
      %v444 = vsel %vm303, %v438, 0
      %v447 = vsel %vm303, %v439, 0
      %449 = vmatpush.msra.mxu0 0.0
      %450 = vmatpush.msra.mxu0 0.0
      %451 = vmatpush.msra.mxu0 0.0
      %452 = vmatpush.msra.mxu0 0.0
      %453 = vmatpush.msra.mxu0 0.0
      %454 = vmatpush.msra.mxu0 0.0
      %455 = vmatpush.msra.mxu0 0.0
      %456 = vmatpush.msra.mxu0 0.0
      %457 = vmatpush.msra.mxu0 0.0
      %458 = vmatpush.msra.mxu0 0.0
      %459 = vmatpush.msra.mxu0 0.0
      %460 = vmatpush.msra.mxu0 0.0
      %461 = vmatpush.msra.mxu0 0.0
      %462 = vmatpush.msra.mxu0 %v436
      %463 = vmatpush.msra.mxu0 %v435
      %464 = vmatpush.msra.mxu0 %v434
      %465 = vmatmul.f32.gmra.mxu0 %v441
      %v466 = vpop.f32.mrf.mxu0
      %v467 = vadd.f32 0.0, %v466
      %468 = vmatmul.f32.gmra.mxu0 %v444
      %v469 = vpop.f32.mrf.mxu0
      %v470 = vadd.f32 0.0, %v469
      %471 = vmatmul.f32.gmra.mxu0 %v447
      %v472 = vpop.f32.mrf.mxu0
      %v473 = vadd.f32 0.0, %v472
      %474 = vdwg.mxu0
      %v475 = vadd.f32 %v431, %v467
      %v476 = vadd.f32 %v432, %v470
      %v477 = vadd.f32 %v433, %v473
      %v478 = vld [vmem:[%s1 + $0x110] sm:$0xff]
      %v479 = vld [vmem:[%s1 + $0x118] sm:$0xff]
      %v480 = vld [vmem:[%s1 + $0x120] sm:$0xff]
      %v481 = vld [vmem:[#allocation2 + $0x4] sm:$0xff]
      %v482 = vld [vmem:[#allocation2 + $0xc] sm:$0xff]
      %v483 = vld [vmem:[#allocation2 + $0x14] sm:$0x1]
      %v485 = vsel %vm303, %v481, 0
      %v488 = vsel %vm303, %v482, 0
      %v491 = vsel %vm303, %v483, 0
      %493 = vmatpush.msra.mxu0 0.0
      %494 = vmatpush.msra.mxu0 0.0
      %495 = vmatpush.msra.mxu0 0.0
      %496 = vmatpush.msra.mxu0 0.0
      %497 = vmatpush.msra.mxu0 0.0
      %498 = vmatpush.msra.mxu0 0.0
      %499 = vmatpush.msra.mxu0 0.0
      %500 = vmatpush.msra.mxu0 0.0
      %501 = vmatpush.msra.mxu0 0.0
      %502 = vmatpush.msra.mxu0 0.0
      %503 = vmatpush.msra.mxu0 0.0
      %504 = vmatpush.msra.mxu0 0.0
      %505 = vmatpush.msra.mxu0 0.0
      %506 = vmatpush.msra.mxu0 %v480
      %507 = vmatpush.msra.mxu0 %v479
      %508 = vmatpush.msra.mxu0 %v478
      %509 = vmatmul.f32.gmra.mxu0 %v485
      %v510 = vpop.f32.mrf.mxu0
      %v511 = vadd.f32 0.0, %v510
      %512 = vmatmul.f32.gmra.mxu0 %v488
      %v513 = vpop.f32.mrf.mxu0
      %v514 = vadd.f32 0.0, %v513
      %515 = vmatmul.f32.gmra.mxu0 %v491
      %v516 = vpop.f32.mrf.mxu0
      %v517 = vadd.f32 0.0, %v516
      %518 = vdwg.mxu0
      %v519 = vadd.f32 %v475, %v511
      %v520 = vadd.f32 %v476, %v514
      %v521 = vadd.f32 %v477, %v517
      %v522 = vld [vmem:[%s1 + $0x128] sm:$0xff]
      %v523 = vld [vmem:[%s1 + $0x130] sm:$0xff]
      %v524 = vld [vmem:[%s1 + $0x138] sm:$0xff]
      %v525 = vld [vmem:[#allocation2 + $0x5] sm:$0xff]
      %v526 = vld [vmem:[#allocation2 + $0xd] sm:$0xff]
      %v527 = vld [vmem:[#allocation2 + $0x15] sm:$0x1]
      %v529 = vsel %vm303, %v525, 0
      %v532 = vsel %vm303, %v526, 0
      %v535 = vsel %vm303, %v527, 0
      %537 = vmatpush.msra.mxu0 0.0
      %538 = vmatpush.msra.mxu0 0.0
      %539 = vmatpush.msra.mxu0 0.0
      %540 = vmatpush.msra.mxu0 0.0
      %541 = vmatpush.msra.mxu0 0.0
      %542 = vmatpush.msra.mxu0 0.0
      %543 = vmatpush.msra.mxu0 0.0
      %544 = vmatpush.msra.mxu0 0.0
      %545 = vmatpush.msra.mxu0 0.0
      %546 = vmatpush.msra.mxu0 0.0
      %547 = vmatpush.msra.mxu0 0.0
      %548 = vmatpush.msra.mxu0 0.0
      %549 = vmatpush.msra.mxu0 0.0
      %550 = vmatpush.msra.mxu0 %v524
      %551 = vmatpush.msra.mxu0 %v523
      %552 = vmatpush.msra.mxu0 %v522
      %553 = vmatmul.f32.gmra.mxu0 %v529
      %v554 = vpop.f32.mrf.mxu0
      %v555 = vadd.f32 0.0, %v554
      %556 = vmatmul.f32.gmra.mxu0 %v532
      %v557 = vpop.f32.mrf.mxu0
      %v558 = vadd.f32 0.0, %v557
      %559 = vmatmul.f32.gmra.mxu0 %v535
      %v560 = vpop.f32.mrf.mxu0
      %v561 = vadd.f32 0.0, %v560
      %562 = vdwg.mxu0
      %v563 = vadd.f32 %v519, %v555
      %v564 = vadd.f32 %v520, %v558
      %v565 = vadd.f32 %v521, %v561
      %v566 = vld [vmem:[%s1 + $0x140] sm:$0xff]
      %v567 = vld [vmem:[%s1 + $0x148] sm:$0xff]
      %v568 = vld [vmem:[%s1 + $0x150] sm:$0xff]
      %v569 = vld [vmem:[#allocation2 + $0x6] sm:$0xff]
      %v570 = vld [vmem:[#allocation2 + $0xe] sm:$0xff]
      %v571 = vld [vmem:[#allocation2 + $0x16] sm:$0x1]
      %v573 = vsel %vm303, %v569, 0
      %v576 = vsel %vm303, %v570, 0
      %v579 = vsel %vm303, %v571, 0
      %581 = vmatpush.msra.mxu0 0.0
      %582 = vmatpush.msra.mxu0 0.0
      %583 = vmatpush.msra.mxu0 0.0
      %584 = vmatpush.msra.mxu0 0.0
      %585 = vmatpush.msra.mxu0 0.0
      %586 = vmatpush.msra.mxu0 0.0
      %587 = vmatpush.msra.mxu0 0.0
      %588 = vmatpush.msra.mxu0 0.0
      %589 = vmatpush.msra.mxu0 0.0
      %590 = vmatpush.msra.mxu0 0.0
      %591 = vmatpush.msra.mxu0 0.0
      %592 = vmatpush.msra.mxu0 0.0
      %593 = vmatpush.msra.mxu0 0.0
      %594 = vmatpush.msra.mxu0 %v568
      %595 = vmatpush.msra.mxu0 %v567
      %596 = vmatpush.msra.mxu0 %v566
      %597 = vmatmul.f32.gmra.mxu0 %v573
      %v598 = vpop.f32.mrf.mxu0
      %v599 = vadd.f32 0.0, %v598
      %600 = vmatmul.f32.gmra.mxu0 %v576
      %v601 = vpop.f32.mrf.mxu0
      %v602 = vadd.f32 0.0, %v601
      %603 = vmatmul.f32.gmra.mxu0 %v579
      %v604 = vpop.f32.mrf.mxu0
      %v605 = vadd.f32 0.0, %v604
      %606 = vdwg.mxu0
      %v607 = vadd.f32 %v563, %v599
      %v608 = vadd.f32 %v564, %v602
      %v609 = vadd.f32 %v565, %v605
      %v610 = vld [vmem:[%s1 + $0x268] sm:$0x1]
      %v611 = vperm.slane %v610, 0
      %v612 = vadd.f32 %v607, %v611
      %v613 = vadd.f32 %v608, %v611
      %v614 = vadd.f32 %v609, %v611
      %v615 = vld [vmem:[%s1 + $0x269] sm:$0x1]
      %v616 = vld [vmem:[%s1 + $0x26a] sm:$0x1]
      %v617 = vsel %vm299, %v612, 0.0
      %618 = vadd.xlane.f32.xlu0 %v617
      %v619 = vpop.xlane.xlu0 %618
      %v620 = vsel %vm299, %v613, 0.0
      %621 = vadd.xlane.f32.xlu0 %v620
      %v622 = vpop.xlane.xlu0 %621
      %vm623 = vcmask 253952
      %v624 = vsel %vm623, %v614, 0.0
      %625 = vadd.xlane.f32.xlu0 %v624
      %v626 = vpop.xlane.xlu0 %625
      %v627 = vrcp.pop 32.0
      %v628 = vmul.f32 32.0, %v627
      %v629 = vsub.f32 1.0, %v628
      %v630 = vmul.f32 %v627, %v629
      %v631 = vadd.f32 %v627, %v630
      %vm632 = vweird.f32 %v627
      %v633 = vsel %vm632, %v627, %v631
      %v634 = vmul.f32 %v619, %v633
      %v635 = vmul.f32 %v622, %v633
      %v636 = vmul.f32 %v626, %v633
      %v637 = vsub.f32 %v612, %v634
      %v638 = vsub.f32 %v613, %v635
      %v639 = vsub.f32 %v614, %v636
      %v640 = vmul.f32 %v637, %v637
      %v641 = vmul.f32 %v638, %v638
      %v642 = vmul.f32 %v639, %v639
      %v643 = vsel %vm299, %v640, 0.0
      %644 = vadd.xlane.f32.xlu0 %v643
      %v645 = vpop.xlane.xlu0 %644
      %v646 = vsel %vm299, %v641, 0.0
      %647 = vadd.xlane.f32.xlu0 %v646
      %v648 = vpop.xlane.xlu0 %647
      %v649 = vsel %vm623, %v642, 0.0
      %650 = vadd.xlane.f32.xlu0 %v649
      %v651 = vpop.xlane.xlu0 %650
      %v652 = vmul.f32 %v645, %v633
      %v653 = vmul.f32 %v648, %v633
      %v654 = vmul.f32 %v651, %v633
      %v655 = vadd.f32 %v652, 1e-06
      %v656 = vadd.f32 %v653, 1e-06
      %v657 = vadd.f32 %v654, 1e-06
      %v658 = vrsqrt.pop %v655
      %v659 = vmul.f32 %v658, %v655
      %v660 = vmul.f32 %v659, %v658
      %v661 = vmul.f32 0.5, %v660
      %v662 = vsub.f32 1.5, %v661
      %v663 = vmul.f32 %v658, %v662
      %vm664 = vweird.f32 %v655
      %vm665 = vweird.f32 %v658
      %vm666 = vmor %vm664, %vm665
      %v667 = vsel %vm666, %v658, %v663
      %v668 = vrsqrt.pop %v656
      %v669 = vmul.f32 %v668, %v656
      %v670 = vmul.f32 %v669, %v668
      %v671 = vmul.f32 0.5, %v670
      %v672 = vsub.f32 1.5, %v671
      %v673 = vmul.f32 %v668, %v672
      %vm674 = vweird.f32 %v656
      %vm675 = vweird.f32 %v668
      %vm676 = vmor %vm674, %vm675
      %v677 = vsel %vm676, %v668, %v673
      %v678 = vrsqrt.pop %v657
      %v679 = vmul.f32 %v678, %v657
      %v680 = vmul.f32 %v679, %v678
      %v681 = vmul.f32 0.5, %v680
      %v682 = vsub.f32 1.5, %v681
      %v683 = vmul.f32 %v678, %v682
      %vm684 = vweird.f32 %v657
      %vm685 = vweird.f32 %v678
      %vm686 = vmor %vm684, %vm685
      %v687 = vsel %vm686, %v678, %v683
      %v688 = vmul.f32 %v637, %v667
      %v689 = vmul.f32 %v638, %v677
      %v690 = vmul.f32 %v639, %v687
      %v691 = vperm.slane %v615, 0
      %v692 = vmul.f32 %v688, %v691
      %v693 = vmul.f32 %v689, %v691
      %v694 = vmul.f32 %v690, %v691
      %v695 = vperm.slane %v616, 0
      %v696 = vadd.f32 %v692, %v695
      %v697 = vadd.f32 %v693, %v695
      %v698 = vadd.f32 %v694, %v695
      %699 = vst.msk [vmem:[#allocation2 + $0x3] sm:$0xff] %vm299, %v696
      %700 = vst.msk [vmem:[#allocation2 + $0xb] sm:$0xff] %vm299, %v697
      %701 = vst.msk [vmem:[#allocation2 + $0x13] sm:$0x1] %vm623, %v698
      %v702 = vld [vmem:[%s1 + $0x158] sm:$0x1]
      %v703 = vld [vmem:[#allocation2] sm:$0xff]
      %v704 = vld [vmem:[#allocation2 + $0x8] sm:$0xff]
      %v705 = vld [vmem:[#allocation2 + $0x10] sm:$0x1]
      %v706 = vperm.slane %v702, 0
      %v707 = vmul.f32 %v703, %v706
      %v708 = vmul.f32 %v704, %v706
      %v709 = vmul.f32 %v705, %v706
      %v710 = vld [vmem:[%s1 + $0x159] sm:$0x1]
      %v711 = vld [vmem:[#allocation2 + $0x1] sm:$0xff]
      %v712 = vld [vmem:[#allocation2 + $0x9] sm:$0xff]
      %v713 = vld [vmem:[#allocation2 + $0x11] sm:$0x1]
      %v714 = vperm.slane %v710, 0
      %v715 = vmul.f32 %v711, %v714
      %v716 = vmul.f32 %v712, %v714
      %v717 = vmul.f32 %v713, %v714
      %v718 = vadd.f32 %v707, %v715
      %v719 = vadd.f32 %v708, %v716
      %v720 = vadd.f32 %v709, %v717
      %v721 = vld [vmem:[%s1 + $0x15a] sm:$0x1]
      %v722 = vld [vmem:[#allocation2 + $0x2] sm:$0xff]
      %v723 = vld [vmem:[#allocation2 + $0xa] sm:$0xff]
      %v724 = vld [vmem:[#allocation2 + $0x12] sm:$0x1]
      %v725 = vperm.slane %v721, 0
      %v726 = vmul.f32 %v722, %v725
      %v727 = vmul.f32 %v723, %v725
      %v728 = vmul.f32 %v724, %v725
      %v729 = vadd.f32 %v718, %v726
      %v730 = vadd.f32 %v719, %v727
      %v731 = vadd.f32 %v720, %v728
      %v732 = vld [vmem:[%s1 + $0x15b] sm:$0x1]
      %v733 = vld [vmem:[#allocation2 + $0x3] sm:$0xff]
      %v734 = vld [vmem:[#allocation2 + $0xb] sm:$0xff]
      %v735 = vld [vmem:[#allocation2 + $0x13] sm:$0x1]
      %v736 = vperm.slane %v732, 0
      %v737 = vmul.f32 %v733, %v736
      %v738 = vmul.f32 %v734, %v736
      %v739 = vmul.f32 %v735, %v736
      %v740 = vadd.f32 %v729, %v737
      %v741 = vadd.f32 %v730, %v738
      %v742 = vadd.f32 %v731, %v739
      %v743 = vld [vmem:[%s1 + $0x15c] sm:$0x1]
      %v744 = vld [vmem:[#allocation2 + $0x4] sm:$0xff]
      %v745 = vld [vmem:[#allocation2 + $0xc] sm:$0xff]
      %v746 = vld [vmem:[#allocation2 + $0x14] sm:$0x1]
      %v747 = vperm.slane %v743, 0
      %v748 = vmul.f32 %v744, %v747
      %v749 = vmul.f32 %v745, %v747
      %v750 = vmul.f32 %v746, %v747
      %v751 = vadd.f32 %v740, %v748
      %v752 = vadd.f32 %v741, %v749
      %v753 = vadd.f32 %v742, %v750
      %v754 = vld [vmem:[%s1 + $0x15d] sm:$0x1]
      %v755 = vld [vmem:[#allocation2 + $0x5] sm:$0xff]
      %v756 = vld [vmem:[#allocation2 + $0xd] sm:$0xff]
      %v757 = vld [vmem:[#allocation2 + $0x15] sm:$0x1]
      %v758 = vperm.slane %v754, 0
      %v759 = vmul.f32 %v755, %v758
      %v760 = vmul.f32 %v756, %v758
      %v761 = vmul.f32 %v757, %v758
      %v762 = vadd.f32 %v751, %v759
      %v763 = vadd.f32 %v752, %v760
      %v764 = vadd.f32 %v753, %v761
      %v765 = vld [vmem:[%s1 + $0x15e] sm:$0x1]
      %v766 = vld [vmem:[#allocation2 + $0x6] sm:$0xff]
      %v767 = vld [vmem:[#allocation2 + $0xe] sm:$0xff]
      %v768 = vld [vmem:[#allocation2 + $0x16] sm:$0x1]
      %v769 = vperm.slane %v765, 0
      %v770 = vmul.f32 %v766, %v769
      %v771 = vmul.f32 %v767, %v769
      %v772 = vmul.f32 %v768, %v769
      %v773 = vadd.f32 %v762, %v770
      %v774 = vadd.f32 %v763, %v771
      %v775 = vadd.f32 %v764, %v772
      %v776 = vld [vmem:[%s1 + $0x26f] sm:$0x1]
      %v777 = vperm.slane %v776, 0
      %v778 = vadd.f32 %v773, %v777
      %v779 = vadd.f32 %v774, %v777
      %v780 = vadd.f32 %v775, %v777
      %v781 = vld [vmem:[%s1 + $0x270] sm:$0x1]
      %v782 = vld [vmem:[%s1 + $0x271] sm:$0x1]
      %v783 = vsel %vm299, %v778, 0.0
      %784 = vadd.xlane.f32.xlu0 %v783
      %v785 = vpop.xlane.xlu0 %784
      %v786 = vsel %vm299, %v779, 0.0
      %787 = vadd.xlane.f32.xlu0 %v786
      %v788 = vpop.xlane.xlu0 %787
      %v789 = vsel %vm623, %v780, 0.0
      %790 = vadd.xlane.f32.xlu0 %v789
      %v791 = vpop.xlane.xlu0 %790
      %v792 = vmul.f32 %v785, %v633
      %v793 = vmul.f32 %v788, %v633
      %v794 = vmul.f32 %v791, %v633
      %v795 = vsub.f32 %v778, %v792
      %v796 = vsub.f32 %v779, %v793
      %v797 = vsub.f32 %v780, %v794
      %v798 = vmul.f32 %v795, %v795
      %v799 = vmul.f32 %v796, %v796
      %v800 = vmul.f32 %v797, %v797
      %v801 = vsel %vm299, %v798, 0.0
      %802 = vadd.xlane.f32.xlu0 %v801
      %v803 = vpop.xlane.xlu0 %802
      %v804 = vsel %vm299, %v799, 0.0
      %805 = vadd.xlane.f32.xlu0 %v804
      %v806 = vpop.xlane.xlu0 %805
      %v807 = vsel %vm623, %v800, 0.0
      %808 = vadd.xlane.f32.xlu0 %v807
      %v809 = vpop.xlane.xlu0 %808
      %v810 = vmul.f32 %v803, %v633
      %v811 = vmul.f32 %v806, %v633
      %v812 = vmul.f32 %v809, %v633
      %v813 = vadd.f32 %v810, 1e-06
      %v814 = vadd.f32 %v811, 1e-06
      %v815 = vadd.f32 %v812, 1e-06
      %v816 = vrsqrt.pop %v813
      %v817 = vmul.f32 %v816, %v813
      %v818 = vmul.f32 %v817, %v816
      %v819 = vmul.f32 0.5, %v818
      %v820 = vsub.f32 1.5, %v819
      %v821 = vmul.f32 %v816, %v820
      %vm822 = vweird.f32 %v813
      %vm823 = vweird.f32 %v816
      %vm824 = vmor %vm822, %vm823
      %v825 = vsel %vm824, %v816, %v821
      %v826 = vrsqrt.pop %v814
      %v827 = vmul.f32 %v826, %v814
      %v828 = vmul.f32 %v827, %v826
      %v829 = vmul.f32 0.5, %v828
      %v830 = vsub.f32 1.5, %v829
      %v831 = vmul.f32 %v826, %v830
      %vm832 = vweird.f32 %v814
      %vm833 = vweird.f32 %v826
      %vm834 = vmor %vm832, %vm833
      %v835 = vsel %vm834, %v826, %v831
      %v836 = vrsqrt.pop %v815
      %v837 = vmul.f32 %v836, %v815
      %v838 = vmul.f32 %v837, %v836
      %v839 = vmul.f32 0.5, %v838
      %v840 = vsub.f32 1.5, %v839
      %v841 = vmul.f32 %v836, %v840
      %vm842 = vweird.f32 %v815
      %vm843 = vweird.f32 %v836
      %vm844 = vmor %vm842, %vm843
      %v845 = vsel %vm844, %v836, %v841
      %v846 = vmul.f32 %v795, %v825
      %v847 = vmul.f32 %v796, %v835
      %v848 = vmul.f32 %v797, %v845
      %v849 = vperm.slane %v781, 0
      %v850 = vmul.f32 %v846, %v849
      %v851 = vmul.f32 %v847, %v849
      %v852 = vmul.f32 %v848, %v849
      %v853 = vperm.slane %v782, 0
      %v854 = vadd.f32 %v850, %v853
      %v855 = vadd.f32 %v851, %v853
      %v856 = vadd.f32 %v852, %v853
      %v857 = vld [vmem:[%s1 + $0x168] sm:$0xff]
      %v858 = vld [vmem:[%s1 + $0x170] sm:$0xff]
      %v859 = vld [vmem:[%s1 + $0x178] sm:$0xff]
      %v860 = vld [vmem:[%s1 + $0x180] sm:$0xff]
      %v861 = vld [vmem:[%s1 + $0x272] sm:$0x1]
      %v862 = vperm.slane %v861, 0
      %v864 = vsel %vm299, %v854, 0
      %v867 = vsel %vm299, %v855, 0
      %v870 = vsel %vm299, %v856, 0
      %872 = vmatpush.msra.mxu0 0.0
      %873 = vmatpush.msra.mxu0 0.0
      %874 = vmatpush.msra.mxu0 0.0
      %875 = vmatpush.msra.mxu0 0.0
      %876 = vmatpush.msra.mxu0 0.0
      %877 = vmatpush.msra.mxu0 0.0
      %878 = vmatpush.msra.mxu0 0.0
      %879 = vmatpush.msra.mxu0 0.0
      %880 = vmatpush.msra.mxu0 0.0
      %881 = vmatpush.msra.mxu0 0.0
      %882 = vmatpush.msra.mxu0 0.0
      %883 = vmatpush.msra.mxu0 0.0
      %884 = vmatpush.msra.mxu0 %v860
      %885 = vmatpush.msra.mxu0 %v859
      %886 = vmatpush.msra.mxu0 %v858
      %887 = vmatpush.msra.mxu0 %v857
      %888 = vmatmul.f32.gmra.mxu0 %v864
      %v889 = vpop.f32.mrf.mxu0
      %v890 = vadd.f32 %v862, %v889
      %891 = vmatmul.f32.gmra.mxu0 %v867
      %v892 = vpop.f32.mrf.mxu0
      %v893 = vadd.f32 %v862, %v892
      %894 = vmatmul.f32.gmra.mxu0 %v870
      %v895 = vpop.f32.mrf.mxu0
      %v896 = vadd.f32 %v862, %v895
      %897 = vdwg.mxu0
      %v898 = vmul.f32 %v890, %v890
      %v899 = vmul.f32 %v893, %v893
      %v900 = vmul.f32 %v896, %v896
      %v901 = vmul.f32 %v890, %v898
      %v902 = vmul.f32 %v893, %v899
      %v903 = vmul.f32 %v896, %v900
      %v904 = vmul.f32 %v901, 0.044715
      %v905 = vmul.f32 %v902, 0.044715
      %v906 = vmul.f32 %v903, 0.044715
      %v907 = vadd.f32 %v890, %v904
      %v908 = vadd.f32 %v893, %v905
      %v909 = vadd.f32 %v896, %v906
      %v910 = vmul.f32 %v907, 0.7978846
      %v911 = vmul.f32 %v908, 0.7978846
      %v912 = vmul.f32 %v909, 0.7978846
      %v913 = vtanh.pop %v910
      %v914 = vtanh.pop %v911
      %v915 = vtanh.pop %v912
      %v916 = vadd.f32 %v913, 1.0
      %v917 = vadd.f32 %v914, 1.0
      %v918 = vadd.f32 %v915, 1.0
      %v919 = vmul.f32 %v916, 0.5
      %v920 = vmul.f32 %v917, 0.5
      %v921 = vmul.f32 %v918, 0.5
      %v922 = vmul.f32 %v890, %v919
      %v923 = vmul.f32 %v893, %v920
      %v924 = vmul.f32 %v896, %v921
      %v925 = vld [vmem:[%s1 + $0x1a8] sm:$0xff]
      %v926 = vld [vmem:[%s1 + $0x1b0] sm:$0xff]
      %v927 = vld [vmem:[%s1 + $0x1b8] sm:$0xff]
      %v928 = vld [vmem:[%s1 + $0x1c0] sm:$0xff]
      %v929 = vld [vmem:[%s1 + $0x1c8] sm:$0xff]
      %v930 = vld [vmem:[%s1 + $0x1d0] sm:$0xff]
      %v931 = vld [vmem:[%s1 + $0x1d8] sm:$0xff]
      %v932 = vld [vmem:[%s1 + $0x1e0] sm:$0xff]
      %v933 = vld [vmem:[%s1 + $0x273] sm:$0x1]
      %v934 = vperm.slane %v933, 0
      %v936 = vsel %vm155, %v922, 0
      %v939 = vsel %vm155, %v923, 0
      %v942 = vsel %vm155, %v924, 0
      %944 = vmatpush.msra.mxu0 0.0
      %945 = vmatpush.msra.mxu0 0.0
      %946 = vmatpush.msra.mxu0 0.0
      %947 = vmatpush.msra.mxu0 0.0
      %948 = vmatpush.msra.mxu0 0.0
      %949 = vmatpush.msra.mxu0 0.0
      %950 = vmatpush.msra.mxu0 0.0
      %951 = vmatpush.msra.mxu0 0.0
      %952 = vmatpush.msra.mxu0 %v932
      %953 = vmatpush.msra.mxu0 %v931
      %954 = vmatpush.msra.mxu0 %v930
      %955 = vmatpush.msra.mxu0 %v929
      %956 = vmatpush.msra.mxu0 %v928
      %957 = vmatpush.msra.mxu0 %v927
      %958 = vmatpush.msra.mxu0 %v926
      %959 = vmatpush.msra.mxu0 %v925
      %960 = vmatmul.f32.gmra.mxu0 %v936
      %v961 = vpop.f32.mrf.mxu0
      %v962 = vadd.f32 %v934, %v961
      %963 = vmatmul.f32.gmra.mxu0 %v939
      %v964 = vpop.f32.mrf.mxu0
      %v965 = vadd.f32 %v934, %v964
      %966 = vmatmul.f32.gmra.mxu0 %v942
      %v967 = vpop.f32.mrf.mxu0
      %v968 = vadd.f32 %v934, %v967
      %969 = vdwg.mxu0
      %v970 = vld [vmem:[%s1 + $0x274] sm:$0x1]
      %v971 = vperm.slane %v970, 0
      %v972 = vmul.f32 %v971, %v962
      %v973 = vmul.f32 %v971, %v965
      %v974 = vmul.f32 %v971, %v968
      %v975 = vadd.f32 %v696, %v972
      %v976 = vadd.f32 %v697, %v973
      %v977 = vadd.f32 %v698, %v974
      %978 = vst.msk [vmem:[#allocation2 + $0x3] sm:$0xff] %vm299, %v975
      %979 = vst.msk [vmem:[#allocation2 + $0xb] sm:$0xff] %vm299, %v976
      %980 = vst.msk [vmem:[#allocation2 + $0x13] sm:$0x1] %vm623, %v977
      %v981 = vld [vmem:[%s1 + $0x160] sm:$0x1]
      %v982 = vld [vmem:[#allocation2] sm:$0xff]
      %v983 = vld [vmem:[#allocation2 + $0x8] sm:$0xff]
      %v984 = vld [vmem:[#allocation2 + $0x10] sm:$0x1]
      %v985 = vperm.slane %v981, 0
      %v986 = vmul.f32 %v982, %v985
      %v987 = vmul.f32 %v983, %v985
      %v988 = vmul.f32 %v984, %v985
      %v989 = vld [vmem:[%s1 + $0x161] sm:$0x1]
      %v990 = vld [vmem:[#allocation2 + $0x1] sm:$0xff]
      %v991 = vld [vmem:[#allocation2 + $0x9] sm:$0xff]
      %v992 = vld [vmem:[#allocation2 + $0x11] sm:$0x1]
      %v993 = vperm.slane %v989, 0
      %v994 = vmul.f32 %v990, %v993
      %v995 = vmul.f32 %v991, %v993
      %v996 = vmul.f32 %v992, %v993
      %v997 = vadd.f32 %v986, %v994
      %v998 = vadd.f32 %v987, %v995
      %v999 = vadd.f32 %v988, %v996
      %v1000 = vld [vmem:[%s1 + $0x162] sm:$0x1]
      %v1001 = vld [vmem:[#allocation2 + $0x2] sm:$0xff]
      %v1002 = vld [vmem:[#allocation2 + $0xa] sm:$0xff]
      %v1003 = vld [vmem:[#allocation2 + $0x12] sm:$0x1]
      %v1004 = vperm.slane %v1000, 0
      %v1005 = vmul.f32 %v1001, %v1004
      %v1006 = vmul.f32 %v1002, %v1004
      %v1007 = vmul.f32 %v1003, %v1004
      %v1008 = vadd.f32 %v997, %v1005
      %v1009 = vadd.f32 %v998, %v1006
      %v1010 = vadd.f32 %v999, %v1007
      %v1011 = vld [vmem:[%s1 + $0x163] sm:$0x1]
      %v1012 = vld [vmem:[#allocation2 + $0x3] sm:$0xff]
      %v1013 = vld [vmem:[#allocation2 + $0xb] sm:$0xff]
      %v1014 = vld [vmem:[#allocation2 + $0x13] sm:$0x1]
      %v1015 = vperm.slane %v1011, 0
      %v1016 = vmul.f32 %v1012, %v1015
      %v1017 = vmul.f32 %v1013, %v1015
      %v1018 = vmul.f32 %v1014, %v1015
      %v1019 = vadd.f32 %v1008, %v1016
      %v1020 = vadd.f32 %v1009, %v1017
      %v1021 = vadd.f32 %v1010, %v1018
      %v1022 = vld [vmem:[%s1 + $0x164] sm:$0x1]
      %v1023 = vld [vmem:[#allocation2 + $0x4] sm:$0xff]
      %v1024 = vld [vmem:[#allocation2 + $0xc] sm:$0xff]
      %v1025 = vld [vmem:[#allocation2 + $0x14] sm:$0x1]
      %v1026 = vperm.slane %v1022, 0
      %v1027 = vmul.f32 %v1023, %v1026
      %v1028 = vmul.f32 %v1024, %v1026
      %v1029 = vmul.f32 %v1025, %v1026
      %v1030 = vadd.f32 %v1019, %v1027
      %v1031 = vadd.f32 %v1020, %v1028
      %v1032 = vadd.f32 %v1021, %v1029
      %v1033 = vld [vmem:[%s1 + $0x165] sm:$0x1]
      %v1034 = vld [vmem:[#allocation2 + $0x5] sm:$0xff]
      %v1035 = vld [vmem:[#allocation2 + $0xd] sm:$0xff]
      %v1036 = vld [vmem:[#allocation2 + $0x15] sm:$0x1]
      %v1037 = vperm.slane %v1033, 0
      %v1038 = vmul.f32 %v1034, %v1037
      %v1039 = vmul.f32 %v1035, %v1037
      %v1040 = vmul.f32 %v1036, %v1037
      %v1041 = vadd.f32 %v1030, %v1038
      %v1042 = vadd.f32 %v1031, %v1039
      %v1043 = vadd.f32 %v1032, %v1040
      %v1044 = vld [vmem:[%s1 + $0x166] sm:$0x1]
      %v1045 = vld [vmem:[#allocation2 + $0x6] sm:$0xff]
      %v1046 = vld [vmem:[#allocation2 + $0xe] sm:$0xff]
      %v1047 = vld [vmem:[#allocation2 + $0x16] sm:$0x1]
      %v1048 = vperm.slane %v1044, 0
      %v1049 = vmul.f32 %v1045, %v1048
      %v1050 = vmul.f32 %v1046, %v1048
      %v1051 = vmul.f32 %v1047, %v1048
      %v1052 = vadd.f32 %v1041, %v1049
      %v1053 = vadd.f32 %v1042, %v1050
      %v1054 = vadd.f32 %v1043, %v1051
      %v1055 = vld [vmem:[%s1 + $0x275] sm:$0x1]
      %v1056 = vperm.slane %v1055, 0
      %v1057 = vadd.f32 %v1052, %v1056
      %v1058 = vadd.f32 %v1053, %v1056
      %v1059 = vadd.f32 %v1054, %v1056
      %v1060 = vld [vmem:[%s1 + $0x276] sm:$0x1]
      %v1061 = vld [vmem:[%s1 + $0x277] sm:$0x1]
      %v1062 = vsel %vm299, %v1057, 0.0
      %1063 = vadd.xlane.f32.xlu0 %v1062
      %v1064 = vpop.xlane.xlu0 %1063
      %v1065 = vsel %vm299, %v1058, 0.0
      %1066 = vadd.xlane.f32.xlu0 %v1065
      %v1067 = vpop.xlane.xlu0 %1066
      %v1068 = vsel %vm623, %v1059, 0.0
      %1069 = vadd.xlane.f32.xlu0 %v1068
      %v1070 = vpop.xlane.xlu0 %1069
      %v1071 = vmul.f32 %v1064, %v633
      %v1072 = vmul.f32 %v1067, %v633
      %v1073 = vmul.f32 %v1070, %v633
      %v1074 = vsub.f32 %v1057, %v1071
      %v1075 = vsub.f32 %v1058, %v1072
      %v1076 = vsub.f32 %v1059, %v1073
      %v1077 = vmul.f32 %v1074, %v1074
      %v1078 = vmul.f32 %v1075, %v1075
      %v1079 = vmul.f32 %v1076, %v1076
      %v1080 = vsel %vm299, %v1077, 0.0
      %1081 = vadd.xlane.f32.xlu0 %v1080
      %v1082 = vpop.xlane.xlu0 %1081
      %v1083 = vsel %vm299, %v1078, 0.0
      %1084 = vadd.xlane.f32.xlu0 %v1083
      %v1085 = vpop.xlane.xlu0 %1084
      %v1086 = vsel %vm623, %v1079, 0.0
      %1087 = vadd.xlane.f32.xlu0 %v1086
      %v1088 = vpop.xlane.xlu0 %1087
      %v1089 = vmul.f32 %v1082, %v633
      %v1090 = vmul.f32 %v1085, %v633
      %v1091 = vmul.f32 %v1088, %v633
      %v1092 = vadd.f32 %v1089, 1e-06
      %v1093 = vadd.f32 %v1090, 1e-06
      %v1094 = vadd.f32 %v1091, 1e-06
      %v1095 = vrsqrt.pop %v1092
      %v1096 = vmul.f32 %v1095, %v1092
      %v1097 = vmul.f32 %v1096, %v1095
      %v1098 = vmul.f32 0.5, %v1097
      %v1099 = vsub.f32 1.5, %v1098
      %v1100 = vmul.f32 %v1095, %v1099
      %vm1101 = vweird.f32 %v1092
      %vm1102 = vweird.f32 %v1095
      %vm1103 = vmor %vm1101, %vm1102
      %v1104 = vsel %vm1103, %v1095, %v1100
      %v1105 = vrsqrt.pop %v1093
      %v1106 = vmul.f32 %v1105, %v1093
      %v1107 = vmul.f32 %v1106, %v1105
      %v1108 = vmul.f32 0.5, %v1107
      %v1109 = vsub.f32 1.5, %v1108
      %v1110 = vmul.f32 %v1105, %v1109
      %vm1111 = vweird.f32 %v1093
      %vm1112 = vweird.f32 %v1105
      %vm1113 = vmor %vm1111, %vm1112
      %v1114 = vsel %vm1113, %v1105, %v1110
      %v1115 = vrsqrt.pop %v1094
      %v1116 = vmul.f32 %v1115, %v1094
      %v1117 = vmul.f32 %v1116, %v1115
      %v1118 = vmul.f32 0.5, %v1117
      %v1119 = vsub.f32 1.5, %v1118
      %v1120 = vmul.f32 %v1115, %v1119
      %vm1121 = vweird.f32 %v1094
      %vm1122 = vweird.f32 %v1115
      %vm1123 = vmor %vm1121, %vm1122
      %v1124 = vsel %vm1123, %v1115, %v1120
      %v1125 = vmul.f32 %v1074, %v1104
      %v1126 = vmul.f32 %v1075, %v1114
      %v1127 = vmul.f32 %v1076, %v1124
      %v1128 = vperm.slane %v1060, 0
      %v1129 = vmul.f32 %v1125, %v1128
      %v1130 = vmul.f32 %v1126, %v1128
      %v1131 = vmul.f32 %v1127, %v1128
      %v1132 = vperm.slane %v1061, 0
      %v1133 = vadd.f32 %v1129, %v1132
      %v1134 = vadd.f32 %v1130, %v1132
      %v1135 = vadd.f32 %v1131, %v1132
      %v1136 = vld [vmem:[%s1 + $0x188] sm:$0xff]
      %v1137 = vld [vmem:[%s1 + $0x190] sm:$0xff]
      %v1138 = vld [vmem:[%s1 + $0x198] sm:$0xff]
      %v1139 = vld [vmem:[%s1 + $0x1a0] sm:$0xff]
      %v1140 = vld [vmem:[%s1 + $0x278] sm:$0x1]
      %v1141 = vperm.slane %v1140, 0
      %v1143 = vsel %vm299, %v1133, 0
      %v1146 = vsel %vm299, %v1134, 0
      %v1149 = vsel %vm299, %v1135, 0
      %1151 = vmatpush.msra.mxu0 0.0
      %1152 = vmatpush.msra.mxu0 0.0
      %1153 = vmatpush.msra.mxu0 0.0
      %1154 = vmatpush.msra.mxu0 0.0
      %1155 = vmatpush.msra.mxu0 0.0
      %1156 = vmatpush.msra.mxu0 0.0
      %1157 = vmatpush.msra.mxu0 0.0
      %1158 = vmatpush.msra.mxu0 0.0
      %1159 = vmatpush.msra.mxu0 0.0
      %1160 = vmatpush.msra.mxu0 0.0
      %1161 = vmatpush.msra.mxu0 0.0
      %1162 = vmatpush.msra.mxu0 0.0
      %1163 = vmatpush.msra.mxu0 %v1139
      %1164 = vmatpush.msra.mxu0 %v1138
      %1165 = vmatpush.msra.mxu0 %v1137
      %1166 = vmatpush.msra.mxu0 %v1136
      %1167 = vmatmul.f32.gmra.mxu0 %v1143
      %v1168 = vpop.f32.mrf.mxu0
      %v1169 = vadd.f32 %v1141, %v1168
      %1170 = vmatmul.f32.gmra.mxu0 %v1146
      %v1171 = vpop.f32.mrf.mxu0
      %v1172 = vadd.f32 %v1141, %v1171
      %1173 = vmatmul.f32.gmra.mxu0 %v1149
      %v1174 = vpop.f32.mrf.mxu0
      %v1175 = vadd.f32 %v1141, %v1174
      %1176 = vdwg.mxu0
      %v1177 = vmul.f32 %v1169, %v1169
      %v1178 = vmul.f32 %v1172, %v1172
      %v1179 = vmul.f32 %v1175, %v1175
      %v1180 = vmul.f32 %v1169, %v1177
      %v1181 = vmul.f32 %v1172, %v1178
      %v1182 = vmul.f32 %v1175, %v1179
      %v1183 = vmul.f32 %v1180, 0.044715
      %v1184 = vmul.f32 %v1181, 0.044715
      %v1185 = vmul.f32 %v1182, 0.044715
      %v1186 = vadd.f32 %v1169, %v1183
      %v1187 = vadd.f32 %v1172, %v1184
      %v1188 = vadd.f32 %v1175, %v1185
      %v1189 = vmul.f32 %v1186, 0.7978846
      %v1190 = vmul.f32 %v1187, 0.7978846
      %v1191 = vmul.f32 %v1188, 0.7978846
      %v1192 = vtanh.pop %v1189
      %v1193 = vtanh.pop %v1190
      %v1194 = vtanh.pop %v1191
      %v1195 = vadd.f32 %v1192, 1.0
      %v1196 = vadd.f32 %v1193, 1.0
      %v1197 = vadd.f32 %v1194, 1.0
      %v1198 = vmul.f32 %v1195, 0.5
      %v1199 = vmul.f32 %v1196, 0.5
      %v1200 = vmul.f32 %v1197, 0.5
      %v1201 = vmul.f32 %v1169, %v1198
      %v1202 = vmul.f32 %v1172, %v1199
      %v1203 = vmul.f32 %v1175, %v1200
      %v1204 = vld [vmem:[%s1 + $0x1e8] sm:$0xff]
      %v1205 = vld [vmem:[%s1 + $0x1f0] sm:$0xff]
      %v1206 = vld [vmem:[%s1 + $0x1f8] sm:$0xff]
      %v1207 = vld [vmem:[%s1 + $0x200] sm:$0xff]
      %v1208 = vld [vmem:[%s1 + $0x208] sm:$0xff]
      %v1209 = vld [vmem:[%s1 + $0x210] sm:$0xff]
      %v1210 = vld [vmem:[%s1 + $0x218] sm:$0xff]
      %v1211 = vld [vmem:[%s1 + $0x220] sm:$0xff]
      %v1212 = vld [vmem:[%s1 + $0x279] sm:$0x1]
      %v1213 = vperm.slane %v1212, 0
      %v1215 = vsel %vm155, %v1201, 0
      %v1218 = vsel %vm155, %v1202, 0
      %v1221 = vsel %vm155, %v1203, 0
      %1223 = vmatpush.msra.mxu0 0.0
      %1224 = vmatpush.msra.mxu0 0.0
      %1225 = vmatpush.msra.mxu0 0.0
      %1226 = vmatpush.msra.mxu0 0.0
      %1227 = vmatpush.msra.mxu0 0.0
      %1228 = vmatpush.msra.mxu0 0.0
      %1229 = vmatpush.msra.mxu0 0.0
      %1230 = vmatpush.msra.mxu0 0.0
      %1231 = vmatpush.msra.mxu0 %v1211
      %1232 = vmatpush.msra.mxu0 %v1210
      %1233 = vmatpush.msra.mxu0 %v1209
      %1234 = vmatpush.msra.mxu0 %v1208
      %1235 = vmatpush.msra.mxu0 %v1207
      %1236 = vmatpush.msra.mxu0 %v1206
      %1237 = vmatpush.msra.mxu0 %v1205
      %1238 = vmatpush.msra.mxu0 %v1204
      %1239 = vmatmul.f32.gmra.mxu0 %v1215
      %v1240 = vpop.f32.mrf.mxu0
      %v1241 = vadd.f32 %v1213, %v1240
      %1242 = vmatmul.f32.gmra.mxu0 %v1218
      %v1243 = vpop.f32.mrf.mxu0
      %v1244 = vadd.f32 %v1213, %v1243
      %1245 = vmatmul.f32.gmra.mxu0 %v1221
      %v1246 = vpop.f32.mrf.mxu0
      %v1247 = vadd.f32 %v1213, %v1246
      %1248 = vdwg.mxu0
      %v1249 = vld [vmem:[%s1 + $0x27a] sm:$0x1]
      %v1250 = vperm.slane %v1249, 0
      %v1251 = vmul.f32 %v1250, %v1241
      %v1252 = vmul.f32 %v1250, %v1244
      %v1253 = vmul.f32 %v1250, %v1247
      %v1254 = vadd.f32 %v975, %v1251
      %v1255 = vadd.f32 %v976, %v1252
      %v1256 = vadd.f32 %v977, %v1253
      %v1257 = vld [vmem:[%s1 + $0x26b] sm:$0x1]
      %v1258 = vld [vmem:[%s1 + $0x26c] sm:$0x1]
      %v1259 = vsel %vm299, %v1254, 0.0
      %1260 = vadd.xlane.f32.xlu0 %v1259
      %v1261 = vpop.xlane.xlu0 %1260
      %v1262 = vsel %vm299, %v1255, 0.0
      %1263 = vadd.xlane.f32.xlu0 %v1262
      %v1264 = vpop.xlane.xlu0 %1263
      %v1265 = vsel %vm623, %v1256, 0.0
      %1266 = vadd.xlane.f32.xlu0 %v1265
      %v1267 = vpop.xlane.xlu0 %1266
      %v1268 = vmul.f32 %v1261, %v633
      %v1269 = vmul.f32 %v1264, %v633
      %v1270 = vmul.f32 %v1267, %v633
      %v1271 = vsub.f32 %v1254, %v1268
      %v1272 = vsub.f32 %v1255, %v1269
      %v1273 = vsub.f32 %v1256, %v1270
      %v1274 = vmul.f32 %v1271, %v1271
      %v1275 = vmul.f32 %v1272, %v1272
      %v1276 = vmul.f32 %v1273, %v1273
      %v1277 = vsel %vm299, %v1274, 0.0
      %1278 = vadd.xlane.f32.xlu0 %v1277
      %v1279 = vpop.xlane.xlu0 %1278
      %v1280 = vsel %vm299, %v1275, 0.0
      %1281 = vadd.xlane.f32.xlu0 %v1280
      %v1282 = vpop.xlane.xlu0 %1281
      %v1283 = vsel %vm623, %v1276, 0.0
      %1284 = vadd.xlane.f32.xlu0 %v1283
      %v1285 = vpop.xlane.xlu0 %1284
      %v1286 = vmul.f32 %v1279, %v633
      %v1287 = vmul.f32 %v1282, %v633
      %v1288 = vmul.f32 %v1285, %v633
      %v1289 = vadd.f32 %v1286, 1e-06
      %v1290 = vadd.f32 %v1287, 1e-06
      %v1291 = vadd.f32 %v1288, 1e-06
      %v1292 = vrsqrt.pop %v1289
      %v1293 = vmul.f32 %v1292, %v1289
      %v1294 = vmul.f32 %v1293, %v1292
      %v1295 = vmul.f32 0.5, %v1294
      %v1296 = vsub.f32 1.5, %v1295
      %v1297 = vmul.f32 %v1292, %v1296
      %vm1298 = vweird.f32 %v1289
      %vm1299 = vweird.f32 %v1292
      %vm1300 = vmor %vm1298, %vm1299
      %v1301 = vsel %vm1300, %v1292, %v1297
      %v1302 = vrsqrt.pop %v1290
      %v1303 = vmul.f32 %v1302, %v1290
      %v1304 = vmul.f32 %v1303, %v1302
      %v1305 = vmul.f32 0.5, %v1304
      %v1306 = vsub.f32 1.5, %v1305
      %v1307 = vmul.f32 %v1302, %v1306
      %vm1308 = vweird.f32 %v1290
      %vm1309 = vweird.f32 %v1302
      %vm1310 = vmor %vm1308, %vm1309
      %v1311 = vsel %vm1310, %v1302, %v1307
      %v1312 = vrsqrt.pop %v1291
      %v1313 = vmul.f32 %v1312, %v1291
      %v1314 = vmul.f32 %v1313, %v1312
      %v1315 = vmul.f32 0.5, %v1314
      %v1316 = vsub.f32 1.5, %v1315
      %v1317 = vmul.f32 %v1312, %v1316
      %vm1318 = vweird.f32 %v1291
      %vm1319 = vweird.f32 %v1312
      %vm1320 = vmor %vm1318, %vm1319
      %v1321 = vsel %vm1320, %v1312, %v1317
      %v1322 = vmul.f32 %v1271, %v1301
      %v1323 = vmul.f32 %v1272, %v1311
      %v1324 = vmul.f32 %v1273, %v1321
      %v1325 = vperm.slane %v1257, 0
      %v1326 = vmul.f32 %v1322, %v1325
      %v1327 = vmul.f32 %v1323, %v1325
      %v1328 = vmul.f32 %v1324, %v1325
      %v1329 = vperm.slane %v1258, 0
      %v1330 = vadd.f32 %v1326, %v1329
      %v1331 = vadd.f32 %v1327, %v1329
      %v1332 = vadd.f32 %v1328, %v1329
      %v1333 = vld [vmem:[%s1 + $0x228] sm:$0xff]
      %v1334 = vld [vmem:[%s1 + $0x230] sm:$0xff]
      %v1335 = vld [vmem:[%s1 + $0x238] sm:$0xff]
      %v1336 = vld [vmem:[%s1 + $0x240] sm:$0xff]
      %v1337 = vld [vmem:[%s1 + $0x26d] sm:$0x1]
      %v1338 = vperm.slane %v1337, 0
      %v1340 = vsel %vm299, %v1330, 0
      %v1343 = vsel %vm299, %v1331, 0
      %v1346 = vsel %vm299, %v1332, 0
      %1348 = vmatpush.msra.mxu0 0.0
      %1349 = vmatpush.msra.mxu0 0.0
      %1350 = vmatpush.msra.mxu0 0.0
      %1351 = vmatpush.msra.mxu0 0.0
      %1352 = vmatpush.msra.mxu0 0.0
      %1353 = vmatpush.msra.mxu0 0.0
      %1354 = vmatpush.msra.mxu0 0.0
      %1355 = vmatpush.msra.mxu0 0.0
      %1356 = vmatpush.msra.mxu0 0.0
      %1357 = vmatpush.msra.mxu0 0.0
      %1358 = vmatpush.msra.mxu0 0.0
      %1359 = vmatpush.msra.mxu0 0.0
      %1360 = vmatpush.msra.mxu0 %v1336
      %1361 = vmatpush.msra.mxu0 %v1335
      %1362 = vmatpush.msra.mxu0 %v1334
      %1363 = vmatpush.msra.mxu0 %v1333
      %1364 = vmatmul.f32.gmra.mxu0 %v1340
      %v1365 = vpop.f32.mrf.mxu0
      %v1366 = vadd.f32 %v1338, %v1365
      %1367 = vmatmul.f32.gmra.mxu0 %v1343
      %v1368 = vpop.f32.mrf.mxu0
      %v1369 = vadd.f32 %v1338, %v1368
      %1370 = vmatmul.f32.gmra.mxu0 %v1346
      %v1371 = vpop.f32.mrf.mxu0
      %v1372 = vadd.f32 %v1338, %v1371
      %1373 = vdwg.mxu0
      %v1374 = vld [vmem:[%s1 + $0x248] sm:$0xff]
      %v1375 = vld [vmem:[%s1 + $0x250] sm:$0xff]
      %v1376 = vld [vmem:[%s1 + $0x258] sm:$0xff]
      %v1377 = vld [vmem:[%s1 + $0x260] sm:$0xff]
      %v1378 = vld [vmem:[%s1 + $0x26e] sm:$0x1]
      %v1379 = vperm.slane %v1378, 0
      %1380 = vmatpush.msra.mxu0 0.0
      %1381 = vmatpush.msra.mxu0 0.0
      %1382 = vmatpush.msra.mxu0 0.0
      %1383 = vmatpush.msra.mxu0 0.0
      %1384 = vmatpush.msra.mxu0 0.0
      %1385 = vmatpush.msra.mxu0 0.0
      %1386 = vmatpush.msra.mxu0 0.0
      %1387 = vmatpush.msra.mxu0 0.0
      %1388 = vmatpush.msra.mxu0 0.0
      %1389 = vmatpush.msra.mxu0 0.0
      %1390 = vmatpush.msra.mxu0 0.0
      %1391 = vmatpush.msra.mxu0 0.0
      %1392 = vmatpush.msra.mxu0 %v1377
      %1393 = vmatpush.msra.mxu0 %v1376
      %1394 = vmatpush.msra.mxu0 %v1375
      %1395 = vmatpush.msra.mxu0 %v1374
      %1396 = vmatmul.f32.gmra.mxu0 %v1340
      %v1397 = vpop.f32.mrf.mxu0
      %v1398 = vadd.f32 %v1379, %v1397
      %1399 = vmatmul.f32.gmra.mxu0 %v1343
      %v1400 = vpop.f32.mrf.mxu0
      %v1401 = vadd.f32 %v1379, %v1400
      %1402 = vmatmul.f32.gmra.mxu0 %v1346
      %v1403 = vpop.f32.mrf.mxu0
      %v1404 = vadd.f32 %v1379, %v1403
      %1405 = vdwg.mxu0
      %v1406 = vmul.f32 %v1366, 1.442695
      %v1407 = vpow.pop %v1406
      %v1408 = vmul.f32 %v1369, 1.442695
      %v1409 = vpow.pop %v1408
      %v1410 = vmul.f32 %v1372, 1.442695
      %v1411 = vpow.pop %v1410
      %v1412 = vmin.f32 %v1407, 100.0
      %v1413 = vmin.f32 %v1409, 100.0
      %v1414 = vmin.f32 %v1411, 100.0
      %v1415 = vand.u32 2147483647, %v1398
      %vm1416 = vcmp.le.f32.partialorder %v1415, 0.7853982
      %vm1417 = vcmp.lt.s32.totalorder %v1398, 0
      %v1418 = vand.u32 %v1398, 2139095040
      %v1419 = vshrl.u32 %v1418, 23
      %v1420 = vsub.s32 %v1419, 127
      %v1421 = vand.u32 2147483647, %v1398
      %v1422 = vand.u32 %v1421, 8388607
      %v1423 = vor.u32 %v1422, 8388608
      %v1424 = vsub.s32 0, %v1423
      %v1425 = vadd.s32 %v1420, 1
      %vm1426 = vcmp.gt.s32.totalorder %v1425, 0
      %v1427 = vsel %vm1426, %v1425, 0
      %v1428 = vshrl.u32 %v1427, 5
      %v1429 = vand.u32 %v1427, 31
      %v1430 = vsub.s32 32, %v1429
      %v1431 = vshrl.u32 683565275, %v1430
      %v1432 = vshll.u32 683565275, %v1429
      %v1433 = vshrl.u32 2475754826, %v1430
      %v1434 = vor.u32 %v1432, %v1433
      %v1435 = vshll.u32 2475754826, %v1429
      %v1436 = vshrl.u32 2131351028, %v1430
      %v1437 = vor.u32 %v1435, %v1436
      %v1438 = vshll.u32 2131351028, %v1429
      %v1439 = vshrl.u32 2102212464, %v1430
      %v1440 = vor.u32 %v1438, %v1439
      %v1441 = vshll.u32 2102212464, %v1429
      %v1442 = vshrl.u32 920167782, %v1430
      %v1443 = vor.u32 %v1441, %v1442
      %v1444 = vshll.u32 920167782, %v1429
      %v1445 = vshrl.u32 1326507024, %v1430
      %v1446 = vor.u32 %v1444, %v1445
      %vm1447 = vcmp.lt.s32.totalorder %v1428, 1
      %vm1448 = vcmp.lt.s32.totalorder %v1428, 2
      %vm1449 = vcmp.lt.s32.totalorder %v1428, 3
      %vm1450 = vcmp.lt.s32.totalorder %v1428, 4
      %v1451 = vsel %vm1447, %v1431, %v1434
      %v1452 = vsel %vm1450, %v1440, 2102212464
      %v1453 = vsel %vm1449, %v1437, %v1452
      %v1454 = vsel %vm1448, %v1451, %v1453
      %v1455 = vsel %vm1447, %v1434, %v1437
      %v1456 = vsel %vm1450, %v1443, 920167782
      %v1457 = vsel %vm1449, %v1440, %v1456
      %v1458 = vsel %vm1448, %v1455, %v1457
      %v1459 = vsel %vm1447, %v1437, %v1440
      %v1460 = vsel %vm1450, %v1446, 1326507024
      %v1461 = vsel %vm1449, %v1443, %v1460
      %v1462 = vsel %vm1448, %v1459, %v1461
      %v1463 = vshll.u32 %v1423, 8
      %v1464 = vand.u32 %v1463, 65535
      %v1465 = vshrl.u32 %v1463, 16
      %v1466 = vand.u32 %v1462, 65535
      %v1467 = vshrl.u32 %v1462, 16
      %v1468 = vmul.u32 %v1464, %v1466
      %v1469 = vmul.u32 %v1464, %v1467
      %v1470 = vmul.u32 %v1465, %v1466
      %v1471 = vmul.u32 %v1465, %v1467
      %v1472 = vshll.u32 %v1469, 16
      %v1473 = vshrl.u32 %v1469, 16
      %v1474 = vshll.u32 %v1470, 16
      %v1475 = vshrl.u32 %v1470, 16
      %vm1476 = vc.u32 %v1468, %v1472
      %v1477 = vsel %vm1476, 1, 0
      %v1478 = vadd.s32 %v1468, %v1472
      %v1479 = vadd.s32 %v1471, %v1477
      %vm1480 = vc.u32 %v1478, %v1474
      %v1481 = vsel %vm1480, 1, 0
      %v1482 = vadd.s32 %v1478, %v1474
      %v1483 = vadd.s32 %v1479, %v1481
      %v1484 = vadd.s32 %v1483, %v1473
      %v1485 = vadd.s32 %v1484, %v1475
      %v1486 = vand.u32 %v1463, 65535
      %v1487 = vshrl.u32 %v1463, 16
      %v1488 = vand.u32 %v1458, 65535
      %v1489 = vshrl.u32 %v1458, 16
      %v1490 = vmul.u32 %v1486, %v1488
      %v1491 = vmul.u32 %v1486, %v1489
      %v1492 = vmul.u32 %v1487, %v1488
      %v1493 = vmul.u32 %v1487, %v1489
      %v1494 = vshll.u32 %v1491, 16
      %v1495 = vshrl.u32 %v1491, 16
      %v1496 = vshll.u32 %v1492, 16
      %v1497 = vshrl.u32 %v1492, 16
      %vm1498 = vc.u32 %v1490, %v1494
      %v1499 = vsel %vm1498, 1, 0
      %v1500 = vadd.s32 %v1490, %v1494
      %v1501 = vadd.s32 %v1493, %v1499
      %vm1502 = vc.u32 %v1500, %v1496
      %v1503 = vsel %vm1502, 1, 0
      %v1504 = vadd.s32 %v1500, %v1496
      %v1505 = vadd.s32 %v1501, %v1503
      %v1506 = vadd.s32 %v1505, %v1495
      %v1507 = vadd.s32 %v1506, %v1497
      %v1508 = vmul.u32 %v1463, %v1454
      %v1509 = vadd.s32 %v1485, %v1504
      %vm1510 = vc.u32 %v1485, %v1504
      %v1511 = vadd.s32 %v1507, 1
      %v1512 = vsel %vm1510, %v1511, %v1507
      %v1513 = vadd.s32 %v1508, %v1512
      %v1514 = vadd.s32 %v1513, 536870912
      %v1515 = vshrl.u32 %v1514, 30
      %v1516 = vshll.u32 %v1515, 30
      %v1517 = vsub.s32 %v1513, %v1516
      %vm1518 = vcmp.lt.s32.totalorder %v1517, 0
      %v1519 = vsub.s32 0, %v1517
      %v1520 = vsel %vm1518, %v1519, %v1517
      %v1521 = vclz %v1520
      %v1522 = vsub.s32 %v1521, 2
      %vm1523 = vcmp.gt.s32.totalorder 0, %v1522
      %v1524 = vsel %vm1523, 0, %v1522
      %v1525 = vsub.s32 32, %v1524
      %v1526 = vshll.u32 %v1517, %v1524
      %v1527 = vshrl.u32 %v1509, %v1525
      %v1528 = vor.u32 %v1526, %v1527
      %v1529 = vsub.s32 4294967266, %v1524
      %v1530 = vadd.s32 %v1529, 127
      %v1531 = vshll.u32 %v1530, 23
      %v1532 = vor.u32 4788187, %v1531
      %v1533 = vand.u32 2147483647, %v1532
      %v1535 = vcvt.s32.f32 %v1528
      %v1536 = vmul.f32 %v1535, %v1533
      %v1537 = vxor.u32 %v1536, 2147483648
      %v1538 = vsel %vm1417, %v1537, %v1536
      %v1539 = vsub.s32 4, %v1515
      %v1540 = vsel %vm1417, %v1539, %v1515
      %v1541 = vsel %vm1416, %v1398, %v1538
      %v1542 = vsel %vm1416, 0, %v1540
      %v1543 = vmul.f32 %v1541, %v1541
      %v1544 = vmul.f32 %v1543, -0.001358992
      %v1545 = vadd.f32 %v1544, 0.041655596
      %v1546 = vmul.f32 %v1543, %v1545
      %v1547 = vadd.f32 %v1546, -0.4999988
      %v1548 = vmul.f32 %v1543, %v1547
      %v1549 = vadd.f32 1.0, %v1548
      %v1550 = vmul.f32 %v1541, %v1541
      %v1551 = vmul.f32 %v1550, -0.00019511016
      %v1552 = vadd.f32 %v1551, 0.008332121
      %v1553 = vmul.f32 %v1550, %v1552
      %v1554 = vadd.f32 %v1553, -0.16666654
      %v1555 = vmul.f32 %v1550, %v1554
      %v1556 = vadd.f32 %v1555, 1.0
      %v1557 = vmul.f32 %v1556, %v1541
      %vm1558 = vweird.f32 %v1398
      %v1559 = vand.u32 %v1542, 3
      %vm1560 = vcmp.lt.s32.totalorder %v1559, 2
      %vm1561 = vcmp.eq.s32.totalorder %v1559, 0
      %v1562 = vxor.u32 %v1557, 2147483648
      %v1563 = vsel %vm1561, %v1549, %v1562
      %vm1564 = vcmp.eq.s32.totalorder %v1559, 2
      %v1565 = vxor.u32 %v1549, 2147483648
      %v1566 = vsel %vm1564, %v1565, %v1557
      %v1567 = vsel %vm1560, %v1563, %v1566
      %v1568 = vsel %vm1558, nan, %v1567
      %v1569 = vand.u32 2147483647, %v1401
      %vm1570 = vcmp.le.f32.partialorder %v1569, 0.7853982
      %vm1571 = vcmp.lt.s32.totalorder %v1401, 0
      %v1572 = vand.u32 %v1401, 2139095040
      %v1573 = vshrl.u32 %v1572, 23
      %v1574 = vsub.s32 %v1573, 127
      %v1575 = vand.u32 2147483647, %v1401
      %v1576 = vand.u32 %v1575, 8388607
      %v1577 = vor.u32 %v1576, 8388608
      %v1578 = vsub.s32 0, %v1577
      %v1579 = vadd.s32 %v1574, 1
      %vm1580 = vcmp.gt.s32.totalorder %v1579, 0
      %v1581 = vsel %vm1580, %v1579, 0
      %v1582 = vshrl.u32 %v1581, 5
      %v1583 = vand.u32 %v1581, 31
      %v1584 = vsub.s32 32, %v1583
      %v1585 = vshrl.u32 683565275, %v1584
      %v1586 = vshll.u32 683565275, %v1583
      %v1587 = vshrl.u32 2475754826, %v1584
      %v1588 = vor.u32 %v1586, %v1587
      %v1589 = vshll.u32 2475754826, %v1583
      %v1590 = vshrl.u32 2131351028, %v1584
      %v1591 = vor.u32 %v1589, %v1590
      %v1592 = vshll.u32 2131351028, %v1583
      %v1593 = vshrl.u32 2102212464, %v1584
      %v1594 = vor.u32 %v1592, %v1593
      %v1595 = vshll.u32 2102212464, %v1583
      %v1596 = vshrl.u32 920167782, %v1584
      %v1597 = vor.u32 %v1595, %v1596
      %v1598 = vshll.u32 920167782, %v1583
      %v1599 = vshrl.u32 1326507024, %v1584
      %v1600 = vor.u32 %v1598, %v1599
      %vm1601 = vcmp.lt.s32.totalorder %v1582, 1
      %vm1602 = vcmp.lt.s32.totalorder %v1582, 2
      %vm1603 = vcmp.lt.s32.totalorder %v1582, 3
      %vm1604 = vcmp.lt.s32.totalorder %v1582, 4
      %v1605 = vsel %vm1601, %v1585, %v1588
      %v1606 = vsel %vm1604, %v1594, 2102212464
      %v1607 = vsel %vm1603, %v1591, %v1606
      %v1608 = vsel %vm1602, %v1605, %v1607
      %v1609 = vsel %vm1601, %v1588, %v1591
      %v1610 = vsel %vm1604, %v1597, 920167782
      %v1611 = vsel %vm1603, %v1594, %v1610
      %v1612 = vsel %vm1602, %v1609, %v1611
      %v1613 = vsel %vm1601, %v1591, %v1594
      %v1614 = vsel %vm1604, %v1600, 1326507024
      %v1615 = vsel %vm1603, %v1597, %v1614
      %v1616 = vsel %vm1602, %v1613, %v1615
      %v1617 = vshll.u32 %v1577, 8
      %v1618 = vand.u32 %v1617, 65535
      %v1619 = vshrl.u32 %v1617, 16
      %v1620 = vand.u32 %v1616, 65535
      %v1621 = vshrl.u32 %v1616, 16
      %v1622 = vmul.u32 %v1618, %v1620
      %v1623 = vmul.u32 %v1618, %v1621
      %v1624 = vmul.u32 %v1619, %v1620
      %v1625 = vmul.u32 %v1619, %v1621
      %v1626 = vshll.u32 %v1623, 16
      %v1627 = vshrl.u32 %v1623, 16
      %v1628 = vshll.u32 %v1624, 16
      %v1629 = vshrl.u32 %v1624, 16
      %vm1630 = vc.u32 %v1622, %v1626
      %v1631 = vsel %vm1630, 1, 0
      %v1632 = vadd.s32 %v1622, %v1626
      %v1633 = vadd.s32 %v1625, %v1631
      %vm1634 = vc.u32 %v1632, %v1628
      %v1635 = vsel %vm1634, 1, 0
      %v1636 = vadd.s32 %v1632, %v1628
      %v1637 = vadd.s32 %v1633, %v1635
      %v1638 = vadd.s32 %v1637, %v1627
      %v1639 = vadd.s32 %v1638, %v1629
      %v1640 = vand.u32 %v1617, 65535
      %v1641 = vshrl.u32 %v1617, 16
      %v1642 = vand.u32 %v1612, 65535
      %v1643 = vshrl.u32 %v1612, 16
      %v1644 = vmul.u32 %v1640, %v1642
      %v1645 = vmul.u32 %v1640, %v1643
      %v1646 = vmul.u32 %v1641, %v1642
      %v1647 = vmul.u32 %v1641, %v1643
      %v1648 = vshll.u32 %v1645, 16
      %v1649 = vshrl.u32 %v1645, 16
      %v1650 = vshll.u32 %v1646, 16
      %v1651 = vshrl.u32 %v1646, 16
      %vm1652 = vc.u32 %v1644, %v1648
      %v1653 = vsel %vm1652, 1, 0
      %v1654 = vadd.s32 %v1644, %v1648
      %v1655 = vadd.s32 %v1647, %v1653
      %vm1656 = vc.u32 %v1654, %v1650
      %v1657 = vsel %vm1656, 1, 0
      %v1658 = vadd.s32 %v1654, %v1650
      %v1659 = vadd.s32 %v1655, %v1657
      %v1660 = vadd.s32 %v1659, %v1649
      %v1661 = vadd.s32 %v1660, %v1651
      %v1662 = vmul.u32 %v1617, %v1608
      %v1663 = vadd.s32 %v1639, %v1658
      %vm1664 = vc.u32 %v1639, %v1658
      %v1665 = vadd.s32 %v1661, 1
      %v1666 = vsel %vm1664, %v1665, %v1661
      %v1667 = vadd.s32 %v1662, %v1666
      %v1668 = vadd.s32 %v1667, 536870912
      %v1669 = vshrl.u32 %v1668, 30
      %v1670 = vshll.u32 %v1669, 30
      %v1671 = vsub.s32 %v1667, %v1670
      %vm1672 = vcmp.lt.s32.totalorder %v1671, 0
      %v1673 = vsub.s32 0, %v1671
      %v1674 = vsel %vm1672, %v1673, %v1671
      %v1675 = vclz %v1674
      %v1676 = vsub.s32 %v1675, 2
      %vm1677 = vcmp.gt.s32.totalorder 0, %v1676
      %v1678 = vsel %vm1677, 0, %v1676
      %v1679 = vsub.s32 32, %v1678
      %v1680 = vshll.u32 %v1671, %v1678
      %v1681 = vshrl.u32 %v1663, %v1679
      %v1682 = vor.u32 %v1680, %v1681
      %v1683 = vsub.s32 4294967266, %v1678
      %v1684 = vadd.s32 %v1683, 127
      %v1685 = vshll.u32 %v1684, 23
      %v1686 = vor.u32 4788187, %v1685
      %v1687 = vand.u32 2147483647, %v1686
      %v1689 = vcvt.s32.f32 %v1682
      %v1690 = vmul.f32 %v1689, %v1687
      %v1691 = vxor.u32 %v1690, 2147483648
      %v1692 = vsel %vm1571, %v1691, %v1690
      %v1693 = vsub.s32 4, %v1669
      %v1694 = vsel %vm1571, %v1693, %v1669
      %v1695 = vsel %vm1570, %v1401, %v1692
      %v1696 = vsel %vm1570, 0, %v1694
      %v1697 = vmul.f32 %v1695, %v1695
      %v1698 = vmul.f32 %v1697, -0.001358992
      %v1699 = vadd.f32 %v1698, 0.041655596
      %v1700 = vmul.f32 %v1697, %v1699
      %v1701 = vadd.f32 %v1700, -0.4999988
      %v1702 = vmul.f32 %v1697, %v1701
      %v1703 = vadd.f32 1.0, %v1702
      %v1704 = vmul.f32 %v1695, %v1695
      %v1705 = vmul.f32 %v1704, -0.00019511016
      %v1706 = vadd.f32 %v1705, 0.008332121
      %v1707 = vmul.f32 %v1704, %v1706
      %v1708 = vadd.f32 %v1707, -0.16666654
      %v1709 = vmul.f32 %v1704, %v1708
      %v1710 = vadd.f32 %v1709, 1.0
      %v1711 = vmul.f32 %v1710, %v1695
      %vm1712 = vweird.f32 %v1401
      %v1713 = vand.u32 %v1696, 3
      %vm1714 = vcmp.lt.s32.totalorder %v1713, 2
      %vm1715 = vcmp.eq.s32.totalorder %v1713, 0
      %v1716 = vxor.u32 %v1711, 2147483648
      %v1717 = vsel %vm1715, %v1703, %v1716
      %vm1718 = vcmp.eq.s32.totalorder %v1713, 2
      %v1719 = vxor.u32 %v1703, 2147483648
      %v1720 = vsel %vm1718, %v1719, %v1711
      %v1721 = vsel %vm1714, %v1717, %v1720
      %v1722 = vsel %vm1712, nan, %v1721
      %v1723 = vand.u32 2147483647, %v1404
      %vm1724 = vcmp.le.f32.partialorder %v1723, 0.7853982
      %vm1725 = vcmp.lt.s32.totalorder %v1404, 0
      %v1726 = vand.u32 %v1404, 2139095040
      %v1727 = vshrl.u32 %v1726, 23
      %v1728 = vsub.s32 %v1727, 127
      %v1729 = vand.u32 2147483647, %v1404
      %v1730 = vand.u32 %v1729, 8388607
      %v1731 = vor.u32 %v1730, 8388608
      %v1732 = vsub.s32 0, %v1731
      %v1733 = vadd.s32 %v1728, 1
      %vm1734 = vcmp.gt.s32.totalorder %v1733, 0
      %v1735 = vsel %vm1734, %v1733, 0
      %v1736 = vshrl.u32 %v1735, 5
      %v1737 = vand.u32 %v1735, 31
      %v1738 = vsub.s32 32, %v1737
      %v1739 = vshrl.u32 683565275, %v1738
      %v1740 = vshll.u32 683565275, %v1737
      %v1741 = vshrl.u32 2475754826, %v1738
      %v1742 = vor.u32 %v1740, %v1741
      %v1743 = vshll.u32 2475754826, %v1737
      %v1744 = vshrl.u32 2131351028, %v1738
      %v1745 = vor.u32 %v1743, %v1744
      %v1746 = vshll.u32 2131351028, %v1737
      %v1747 = vshrl.u32 2102212464, %v1738
      %v1748 = vor.u32 %v1746, %v1747
      %v1749 = vshll.u32 2102212464, %v1737
      %v1750 = vshrl.u32 920167782, %v1738
      %v1751 = vor.u32 %v1749, %v1750
      %v1752 = vshll.u32 920167782, %v1737
      %v1753 = vshrl.u32 1326507024, %v1738
      %v1754 = vor.u32 %v1752, %v1753
      %vm1755 = vcmp.lt.s32.totalorder %v1736, 1
      %vm1756 = vcmp.lt.s32.totalorder %v1736, 2
      %vm1757 = vcmp.lt.s32.totalorder %v1736, 3
      %vm1758 = vcmp.lt.s32.totalorder %v1736, 4
      %v1759 = vsel %vm1755, %v1739, %v1742
      %v1760 = vsel %vm1758, %v1748, 2102212464
      %v1761 = vsel %vm1757, %v1745, %v1760
      %v1762 = vsel %vm1756, %v1759, %v1761
      %v1763 = vsel %vm1755, %v1742, %v1745
      %v1764 = vsel %vm1758, %v1751, 920167782
      %v1765 = vsel %vm1757, %v1748, %v1764
      %v1766 = vsel %vm1756, %v1763, %v1765
      %v1767 = vsel %vm1755, %v1745, %v1748
      %v1768 = vsel %vm1758, %v1754, 1326507024
      %v1769 = vsel %vm1757, %v1751, %v1768
      %v1770 = vsel %vm1756, %v1767, %v1769
      %v1771 = vshll.u32 %v1731, 8
      %v1772 = vand.u32 %v1771, 65535
      %v1773 = vshrl.u32 %v1771, 16
      %v1774 = vand.u32 %v1770, 65535
      %v1775 = vshrl.u32 %v1770, 16
      %v1776 = vmul.u32 %v1772, %v1774
      %v1777 = vmul.u32 %v1772, %v1775
      %v1778 = vmul.u32 %v1773, %v1774
      %v1779 = vmul.u32 %v1773, %v1775
      %v1780 = vshll.u32 %v1777, 16
      %v1781 = vshrl.u32 %v1777, 16
      %v1782 = vshll.u32 %v1778, 16
      %v1783 = vshrl.u32 %v1778, 16
      %vm1784 = vc.u32 %v1776, %v1780
      %v1785 = vsel %vm1784, 1, 0
      %v1786 = vadd.s32 %v1776, %v1780
      %v1787 = vadd.s32 %v1779, %v1785
      %vm1788 = vc.u32 %v1786, %v1782
      %v1789 = vsel %vm1788, 1, 0
      %v1790 = vadd.s32 %v1786, %v1782
      %v1791 = vadd.s32 %v1787, %v1789
      %v1792 = vadd.s32 %v1791, %v1781
      %v1793 = vadd.s32 %v1792, %v1783
      %v1794 = vand.u32 %v1771, 65535
      %v1795 = vshrl.u32 %v1771, 16
      %v1796 = vand.u32 %v1766, 65535
      %v1797 = vshrl.u32 %v1766, 16
      %v1798 = vmul.u32 %v1794, %v1796
      %v1799 = vmul.u32 %v1794, %v1797
      %v1800 = vmul.u32 %v1795, %v1796
      %v1801 = vmul.u32 %v1795, %v1797
      %v1802 = vshll.u32 %v1799, 16
      %v1803 = vshrl.u32 %v1799, 16
      %v1804 = vshll.u32 %v1800, 16
      %v1805 = vshrl.u32 %v1800, 16
      %vm1806 = vc.u32 %v1798, %v1802
      %v1807 = vsel %vm1806, 1, 0
      %v1808 = vadd.s32 %v1798, %v1802
      %v1809 = vadd.s32 %v1801, %v1807
      %vm1810 = vc.u32 %v1808, %v1804
      %v1811 = vsel %vm1810, 1, 0
      %v1812 = vadd.s32 %v1808, %v1804
      %v1813 = vadd.s32 %v1809, %v1811
      %v1814 = vadd.s32 %v1813, %v1803
      %v1815 = vadd.s32 %v1814, %v1805
      %v1816 = vmul.u32 %v1771, %v1762
      %v1817 = vadd.s32 %v1793, %v1812
      %vm1818 = vc.u32 %v1793, %v1812
      %v1819 = vadd.s32 %v1815, 1
      %v1820 = vsel %vm1818, %v1819, %v1815
      %v1821 = vadd.s32 %v1816, %v1820
      %v1822 = vadd.s32 %v1821, 536870912
      %v1823 = vshrl.u32 %v1822, 30
      %v1824 = vshll.u32 %v1823, 30
      %v1825 = vsub.s32 %v1821, %v1824
      %vm1826 = vcmp.lt.s32.totalorder %v1825, 0
      %v1827 = vsub.s32 0, %v1825
      %v1828 = vsel %vm1826, %v1827, %v1825
      %v1829 = vclz %v1828
      %v1830 = vsub.s32 %v1829, 2
      %vm1831 = vcmp.gt.s32.totalorder 0, %v1830
      %v1832 = vsel %vm1831, 0, %v1830
      %v1833 = vsub.s32 32, %v1832
      %v1834 = vshll.u32 %v1825, %v1832
      %v1835 = vshrl.u32 %v1817, %v1833
      %v1836 = vor.u32 %v1834, %v1835
      %v1837 = vsub.s32 4294967266, %v1832
      %v1838 = vadd.s32 %v1837, 127
      %v1839 = vshll.u32 %v1838, 23
      %v1840 = vor.u32 4788187, %v1839
      %v1841 = vand.u32 2147483647, %v1840
      %v1843 = vcvt.s32.f32 %v1836
      %v1844 = vmul.f32 %v1843, %v1841
      %v1845 = vxor.u32 %v1844, 2147483648
      %v1846 = vsel %vm1725, %v1845, %v1844
      %v1847 = vsub.s32 4, %v1823
      %v1848 = vsel %vm1725, %v1847, %v1823
      %v1849 = vsel %vm1724, %v1404, %v1846
      %v1850 = vsel %vm1724, 0, %v1848
      %v1851 = vmul.f32 %v1849, %v1849
      %v1852 = vmul.f32 %v1851, -0.001358992
      %v1853 = vadd.f32 %v1852, 0.041655596
      %v1854 = vmul.f32 %v1851, %v1853
      %v1855 = vadd.f32 %v1854, -0.4999988
      %v1856 = vmul.f32 %v1851, %v1855
      %v1857 = vadd.f32 1.0, %v1856
      %v1858 = vmul.f32 %v1849, %v1849
      %v1859 = vmul.f32 %v1858, -0.00019511016
      %v1860 = vadd.f32 %v1859, 0.008332121
      %v1861 = vmul.f32 %v1858, %v1860
      %v1862 = vadd.f32 %v1861, -0.16666654
      %v1863 = vmul.f32 %v1858, %v1862
      %v1864 = vadd.f32 %v1863, 1.0
      %v1865 = vmul.f32 %v1864, %v1849
      %vm1866 = vweird.f32 %v1404
      %v1867 = vand.u32 %v1850, 3
      %vm1868 = vcmp.lt.s32.totalorder %v1867, 2
      %vm1869 = vcmp.eq.s32.totalorder %v1867, 0
      %v1870 = vxor.u32 %v1865, 2147483648
      %v1871 = vsel %vm1869, %v1857, %v1870
      %vm1872 = vcmp.eq.s32.totalorder %v1867, 2
      %v1873 = vxor.u32 %v1857, 2147483648
      %v1874 = vsel %vm1872, %v1873, %v1865
      %v1875 = vsel %vm1868, %v1871, %v1874
      %v1876 = vsel %vm1866, nan, %v1875
      %v1877 = vmul.f32 %v1412, %v1568
      %v1878 = vmul.f32 %v1413, %v1722
      %v1879 = vmul.f32 %v1414, %v1876
      %v1880 = vld [vmem:[%s1 + $0x68] sm:$0xff]
      %v1881 = vld [vmem:[%s1 + $0x70] sm:$0xff]
      %v1882 = vld [vmem:[%s1 + $0x78] sm:$0xff]
      %v1883 = vld [vmem:[%s1 + $0x80] sm:$0xff]
      %v1884 = vld [vmem:[%s1 + $0x88] sm:$0xff]
      %v1885 = vld [vmem:[%s1 + $0x90] sm:$0xff]
      %v1886 = vld [vmem:[%s1 + $0x98] sm:$0xff]
      %v1887 = vld [vmem:[%s1 + $0xa0] sm:$0xff]
      %v1888 = vld [vmem:[%s1 + $0xa8] sm:$0x3]
      %vm1889 = vcmask 539648
      %v1891 = vsel %vm1889, %v1877, 0
      %v1894 = vsel %vm1889, %v1878, 0
      %v1897 = vsel %vm1889, %v1879, 0
      %vm1899 = vcmask 1041408
      %v1901 = vsel %vm1899, %v1888, 0
      %1903 = vmatpush.msra.mxu0 0.0
      %1904 = vmatpush.msra.mxu0 0.0
      %1905 = vmatpush.msra.mxu0 0.0
      %1906 = vmatpush.msra.mxu0 0.0
      %1907 = vmatpush.msra.mxu0 0.0
      %1908 = vmatpush.msra.mxu0 0.0
      %1909 = vmatpush.msra.mxu0 0.0
      %1910 = vmatpush.msra.mxu0 %v1901
      %1911 = vmatpush.msra.mxu0 %v1887
      %1912 = vmatpush.msra.mxu0 %v1886
      %1913 = vmatpush.msra.mxu0 %v1885
      %1914 = vmatpush.msra.mxu0 %v1884
      %1915 = vmatpush.msra.mxu0 %v1883
      %1916 = vmatpush.msra.mxu0 %v1882
      %1917 = vmatpush.msra.mxu0 %v1881
      %1918 = vmatpush.msra.mxu0 %v1880
      %1919 = vmatmul.f32.gmra.mxu0 %v1891
      %v1920 = vpop.f32.mrf.mxu0
      %v1921 = vadd.f32 0.0, %v1920
      %1922 = vmatmul.f32.gmra.mxu0 %v1894
      %v1923 = vpop.f32.mrf.mxu0
      %v1924 = vadd.f32 0.0, %v1923
      %1925 = vmatmul.f32.gmra.mxu0 %v1897
      %v1926 = vpop.f32.mrf.mxu0
      %v1927 = vadd.f32 0.0, %v1926
      %1928 = vdwg.mxu0
      %vm1929 = vcmask 130048
      %1930 = vst.msk [vmem:[#allocation3] sm:$0xff] %vm1929, 0.0
      %1931 = vst.msk [vmem:[#allocation3 + $0x8] sm:$0xff] %vm1929, 0.0
      %1932 = vst.msk [vmem:[#allocation3 + $0x10] sm:$0xff] %vm1929, 0.0
      %v1933 = vld [vmem:[#allocation3] sm:$0xff]
      %v1934 = vld [vmem:[#allocation3 + $0x8] sm:$0xff]
      %v1935 = vld [vmem:[#allocation3 + $0x10] sm:$0x1]
      %v1936 = vadd.f32 %v1933, %v1921
      %v1937 = vadd.f32 %v1934, %v1924
      %v1938 = vadd.f32 %v1935, %v1927
      %1939 = vst.msk [vmem:[#allocation3] sm:$0xff] %vm1929, %v1936
      %1940 = vst.msk [vmem:[#allocation3 + $0x8] sm:$0xff] %vm1929, %v1937
      %vm1941 = vcmask 122880
      %1942 = vst.msk [vmem:[#allocation3 + $0x10] sm:$0x1] %vm1941, %v1938
      %v1943 = vld [vmem:[#allocation3 + $0x1] sm:$0xff]
      %v1944 = vld [vmem:[#allocation3 + $0x9] sm:$0xff]
      %v1945 = vld [vmem:[#allocation3 + $0x11] sm:$0x1]
      %1949 = vrot.lane.b32.xlu0 %v1921, 112
      %v1950 = vpop.permute.xlu0 %1949
      %1951 = vrot.lane.b32.xlu0 %v1924, 112
      %v1952 = vpop.permute.xlu0 %1951
      %1953 = vrot.lane.b32.xlu0 %v1927, 112
      %v1954 = vpop.permute.xlu0 %1953
      %v1958 = vadd.f32 %v1943, %v1950
      %v1959 = vadd.f32 %v1944, %v1952
      %v1960 = vadd.f32 %v1945, %v1954
      %1961 = vst.msk [vmem:[#allocation3 + $0x1] sm:$0xff] %vm1929, %v1958
      %1962 = vst.msk [vmem:[#allocation3 + $0x9] sm:$0xff] %vm1929, %v1959
      %1963 = vst.msk [vmem:[#allocation3 + $0x11] sm:$0x1] %vm1941, %v1960
      %v1964 = vld [vmem:[#allocation3 + $0x2] sm:$0xff]
      %v1965 = vld [vmem:[#allocation3 + $0xa] sm:$0xff]
      %v1966 = vld [vmem:[#allocation3 + $0x12] sm:$0x1]
      %1967 = vrot.lane.b32.xlu0 %v1921, 96
      %v1968 = vpop.permute.xlu0 %1967
      %1969 = vrot.lane.b32.xlu0 %v1924, 96
      %v1970 = vpop.permute.xlu0 %1969
      %1971 = vrot.lane.b32.xlu0 %v1927, 96
      %v1972 = vpop.permute.xlu0 %1971
      %v1976 = vadd.f32 %v1964, %v1968
      %v1977 = vadd.f32 %v1965, %v1970
      %v1978 = vadd.f32 %v1966, %v1972
      %1979 = vst.msk [vmem:[#allocation3 + $0x2] sm:$0xff] %vm1929, %v1976
      %1980 = vst.msk [vmem:[#allocation3 + $0xa] sm:$0xff] %vm1929, %v1977
      %1981 = vst.msk [vmem:[#allocation3 + $0x12] sm:$0x1] %vm1941, %v1978
      %v1982 = vld [vmem:[#allocation3 + $0x3] sm:$0xff]
      %v1983 = vld [vmem:[#allocation3 + $0xb] sm:$0xff]
      %v1984 = vld [vmem:[#allocation3 + $0x13] sm:$0x1]
      %1985 = vrot.lane.b32.xlu0 %v1921, 80
      %v1986 = vpop.permute.xlu0 %1985
      %1987 = vrot.lane.b32.xlu0 %v1924, 80
      %v1988 = vpop.permute.xlu0 %1987
      %1989 = vrot.lane.b32.xlu0 %v1927, 80
      %v1990 = vpop.permute.xlu0 %1989
      %v1994 = vadd.f32 %v1982, %v1986
      %v1995 = vadd.f32 %v1983, %v1988
      %v1996 = vadd.f32 %v1984, %v1990
      %1997 = vst.msk [vmem:[#allocation3 + $0x3] sm:$0xff] %vm1929, %v1994
      %1998 = vst.msk [vmem:[#allocation3 + $0xb] sm:$0xff] %vm1929, %v1995
      %1999 = vst.msk [vmem:[#allocation3 + $0x13] sm:$0x1] %vm1941, %v1996
      %v2000 = vld [vmem:[%s1 + $0x280] sm:$0xff]
      %v2001 = vld [vmem:[%s1 + $0x288] sm:$0xff]
      %v2002 = vld [vmem:[#allocation3 + $0x2] sm:$0xff]
      %v2003 = vld [vmem:[#allocation3 + $0xa] sm:$0xff]
      %v2004 = vmul.f32 %v2002, %v2000
      %v2005 = vmul.f32 %v2003, %v2001
      %2006 = vst.msk [vmem:[%s143] sm:$0xff] %vm1929, %v2004
      %2007 = vst.msk [vmem:[%s143 + $0x8] sm:$0xff] %vm1929, %v2005
      %p2008 = scmp.lt.s32.totalorder %s13, 1
      %s2009 = scalar_select %p2008, %s13, 1
      %s2010 = smul.addr %s2009, 2
      %s2011 = smul.addr %s2010, 8
      %s2012 = scalar_lea.vmem %s2, %s2011
      // Predicated region
      $region29: #{vocos_forward.1} parent=27 // pred_check
        %p2013 = pneg %p78
      $region30: #{vocos_forward.1} parent=27 // pred_check_branch
        %2015 = sbr.rel (%p2013) target = $region32
      $region31: #{vocos_forward.1} parent=27 // pred_region
        _
      $region32: #{vocos_forward.1} parent=27 // pred_fallthru
        _
    $region28: #{vocos_forward.1} parent=5 // pred_fallthru
      _
    %p2016 = scmp.le.s32.totalorder 2, %s8
    // Predicated region
    $region33: #{vocos_forward.1} parent=5 // pred_check
      %p2017 = pneg %p2016
    $region34: #{vocos_forward.1} parent=5 // pred_check_branch
      %2019 = sbr.rel (%p2017) target = $region36
    $region35: #{vocos_forward.1} parent=5 // pred_region
      %s2020 = ssub.s32 %s8, 2
      // Predicated region
      $region37: #{vocos_forward.1} parent=35 // pred_check
        %p2021 = pneg %p84
      $region38: #{vocos_forward.1} parent=35 // pred_check_branch
        %2023 = sbr.rel (%p2021) target = $region40
      $region39: #{vocos_forward.1} parent=35 // pred_region
        %p2024 = scmp.lt.s32.totalorder %s14, 1
        %s2025 = scalar_select %p2024, %s14, 1
        %s2026 = smul.addr %s2025, 2
        %s2027 = smul.addr %s2026, 8
        %s2028 = scalar_lea.vmem %s2, %s2027
      $region40: #{vocos_forward.1} parent=35 // pred_fallthru
        _
    $region36: #{vocos_forward.1} parent=5 // pred_fallthru
      _
  $region6: #{vocos_forward.1} parent=0 // loop_footer
    %s12 = sadd.s32 1, %s8
  $region7: #{vocos_forward.1} parent=0 // loop_footer_branch
    %7 = sbr.rel target = $region3
  $region8: #{vocos_forward.1} parent=0 // loop_exit
    _

</llo_original>
